<compile_context>
chip_gen: v6e
topology: v6e:2x2x1
jax: 0.10.0
libtpu: 0.0.40
codegen_flags: <defaults>
</compile_context>

<pallas_src>
import functools

import jax
import jax.numpy as jnp
from jax.experimental import pallas as pl
from jax.experimental.pallas import tpu as pltpu


def _round_up(n, m):
    return ((n + m - 1) // m) * m


def _lstm_kernel(x_ref, w_ih_ref, w_hh_ref, b_ref, w_lin_ref, b_lin_ref,
                 out_ref, gates_ref, *, seq_len, hp, input_size):
    # ---- whole-sequence input projection, staged in VMEM scratch ------------
    if input_size == 1:
        # (L,1) * (1,4*HP) broadcast multiply on the VPU; avoids a K=1 MXU pass.
        gates_ref[...] = x_ref[...] * w_ih_ref[...] + b_ref[...]
    else:
        gates_ref[...] = (jnp.dot(x_ref[...], w_ih_ref[...],
                                  preferred_element_type=jnp.float32)
                          + b_ref[...])

    # ---- recurrence ----------------------------------------------------------
    def step(t, h, c):
        # Per-step row load from VMEM scratch (sublane 0, no XLU extract) and
        # recurrent matmul with the RHS streamed from VMEM (not hoisted).
        gates = gates_ref[pl.ds(t, 1), :] + jnp.dot(
            h, w_hh_ref[...], preferred_element_type=jnp.float32)  # (1, 4*HP)

        # Gate order (i, f, o, g): one wide sigmoid, one tanh, lane-aligned slices.
        sig = jax.nn.sigmoid(gates[:, :3 * hp])
        g_g = jnp.tanh(gates[:, 3 * hp:])
        i_g = sig[:, 0 * hp:1 * hp]
        f_g = sig[:, 1 * hp:2 * hp]
        o_g = sig[:, 2 * hp:3 * hp]

        c_new = f_g * c + i_g * g_g
        h_new = o_g * jnp.tanh(c_new)
        return h_new, c_new

    h = jnp.zeros((1, hp), jnp.float32)
    c = jnp.zeros((1, hp), jnp.float32)

    if seq_len <= 32:
        # Full unroll: maximum LLO scheduling visibility for short sequences.
        for t in range(seq_len):
            h, c = step(t, h, c)
    else:
        # Long sequences: bounded code size / live ranges, modest unroll.
        def body(t, carry):
            hh, cc = carry
            return step(t, hh, cc)
        h, c = jax.lax.fori_loop(0, seq_len, body, (h, c), unroll=8)

    # predictions[-1] = Linear(h_{L-1}); lane-padded output, sliced in wrapper.
    out_ref[...] = (jnp.dot(h, w_lin_ref[...],
                            preferred_element_type=jnp.float32)
                    + b_lin_ref[...])


def lstm_forward(input_seq, params, hidden=100):
    """input_seq: (L,) or (L, input_size) float32.  Returns (output_size,)."""
    x = input_seq.reshape(input_seq.shape[0], -1).astype(jnp.float32)
    seq_len, input_size = x.shape

    w_ih, w_hh, b_ih, b_hh, w_lin, b_lin = params
    out_size = w_lin.shape[0]

    H = hidden
    HP = _round_up(H, 128)          # lane-aligned hidden
    OUT_P = _round_up(out_size, 128)

    # --- wrapper-side glue: reorder gates (i,f,g,o) -> (i,f,o,g), transpose,
    #     zero-pad each gate block to HP lanes, fold the two biases.  Padded
    #     lanes have zero weights/bias so h/c padded lanes stay exactly zero.
    def reorder_gates(a):            # first dim 4H
        return jnp.concatenate(
            [a[0:H], a[H:2 * H], a[3 * H:4 * H], a[2 * H:3 * H]], axis=0)

    def pad_gate_cols(w_t):          # (rows, 4H) -> (rows, 4*HP)
        rows = w_t.shape[0]
        return jnp.pad(w_t.reshape(rows, 4, H),
                       ((0, 0), (0, 0), (0, HP - H))).reshape(rows, 4 * HP)

    w_ih_p = pad_gate_cols(
        jnp.transpose(reorder_gates(w_ih)).astype(jnp.float32))     # (in, 4*HP)
    w_hh_p = pad_gate_cols(
        jnp.transpose(reorder_gates(w_hh)).astype(jnp.float32))     # (H, 4*HP)
    w_hh_p = jnp.pad(w_hh_p, ((0, HP - H), (0, 0)))                 # (HP, 4*HP)
    b_p = pad_gate_cols(
        reorder_gates((b_ih + b_hh).astype(jnp.float32))[None, :])  # (1, 4*HP)
    w_lin_p = jnp.pad(jnp.transpose(w_lin).astype(jnp.float32),
                      ((0, HP - H), (0, OUT_P - out_size)))         # (HP, OUT_P)
    b_lin_p = jnp.pad(b_lin.astype(jnp.float32)[None, :],
                      ((0, 0), (0, OUT_P - out_size)))              # (1, OUT_P)

    kernel = functools.partial(_lstm_kernel, seq_len=seq_len, hp=HP,
                               input_size=input_size)
    vmem = pl.BlockSpec(memory_space=pltpu.MemorySpace.VMEM)

    out = pl.pallas_call(
        kernel,
        out_shape=jax.ShapeDtypeStruct((1, OUT_P), jnp.float32),
        in_specs=[vmem] * 6,
        out_specs=vmem,
        scratch_shapes=[pltpu.VMEM((seq_len, 4 * HP), jnp.float32)],
    )(x, w_ih_p, w_hh_p, b_p, w_lin_p, b_lin_p)

    return out[0, :out_size]                                        # (output_size,)


def init_params(key, input_size=1, hidden=100, output_size=1):
    """Deterministic synthetic params, PyTorch-style uniform(+-1/sqrt(H))."""
    ks = jax.random.split(key, 6)
    s = 1.0 / jnp.sqrt(jnp.float32(hidden))
    u = lambda k, shape: jax.random.uniform(k, shape, jnp.float32, -s, s)
    w_ih = u(ks[0], (4 * hidden, input_size))   # gate order i, f, g, o
    w_hh = u(ks[1], (4 * hidden, hidden))
    b_ih = u(ks[2], (4 * hidden,))
    b_hh = u(ks[3], (4 * hidden,))
    w_lin = u(ks[4], (output_size, hidden))
    b_lin = u(ks[5], (output_size,))
    return (w_ih, w_hh, b_ih, b_hh, w_lin, b_lin)


def lstm_forward_ref(input_seq, params, hidden=100):
    """Pure-JAX reference matching torch.nn.LSTM(+Linear) semantics."""
    x = input_seq.reshape(input_seq.shape[0], -1).astype(jnp.float32)
    w_ih, w_hh, b_ih, b_hh, w_lin, b_lin = params

    def step(carry, x_t):
        h, c = carry
        gates = x_t @ w_ih.T + h @ w_hh.T + b_ih + b_hh
        i = jax.nn.sigmoid(gates[0 * hidden:1 * hidden])
        f = jax.nn.sigmoid(gates[1 * hidden:2 * hidden])
        g = jnp.tanh(gates[2 * hidden:3 * hidden])
        o = jax.nn.sigmoid(gates[3 * hidden:4 * hidden])
        c_new = f * c + i * g
        h_new = o * jnp.tanh(c_new)
        return (h_new, c_new), h_new

    h0 = jnp.zeros((hidden,), jnp.float32)
    c0 = jnp.zeros((hidden,), jnp.float32)
    (_, _), hs = jax.lax.scan(step, (h0, c0), x)
    preds = hs @ w_lin.T + b_lin
    return preds[-1]


if __name__ == "__main__":
    key = jax.random.PRNGKey(0)
    k_param, k_x = jax.random.split(key)

    HIDDEN = 100
    INPUT_SIZE = 1
    OUTPUT_SIZE = 1
    SEQ_LEN = 8

    params = init_params(k_param, INPUT_SIZE, HIDDEN, OUTPUT_SIZE)
    # forward() does input_seq.view(len(input_seq), 1, -1): a 1-D sequence.
    input_seq = jax.random.normal(k_x, (SEQ_LEN,), jnp.float32)

    out = lstm_forward(input_seq, params, hidden=HIDDEN)
    out = jax.block_until_ready(out)

    ref = lstm_forward_ref(input_seq, params, hidden=HIDDEN)
    assert out.shape == (OUTPUT_SIZE,)
    assert jnp.allclose(out, ref, atol=1e-3, rtol=1e-3), (out, ref)

    print("KERNEL_OK")
</pallas_src>

<mosaic_0001>
module attributes {stable_mosaic.version = 11 : i64} {
  func.func @_lstm_kernel(%arg0: memref<8x1xf32, #tpu.memory_space<vmem>>, %arg1: memref<1x512xf32, #tpu.memory_space<vmem>>, %arg2: memref<128x512xf32, #tpu.memory_space<vmem>>, %arg3: memref<1x512xf32, #tpu.memory_space<vmem>>, %arg4: memref<128x128xf32, #tpu.memory_space<vmem>>, %arg5: memref<1x128xf32, #tpu.memory_space<vmem>>, %arg6: memref<1x128xf32, #tpu.memory_space<vmem>>, %arg7: memref<8x512xf32, #tpu.memory_space<vmem>>) attributes {dimension_semantics = [], scalar_prefetch = 0 : i64, scratch_operands = 1 : i64, tpu.core_type = #tpu.core_type<tc>} {
    %c0 = arith.constant 0 : index
    %c0_0 = arith.constant 0 : index
    %0 = vector.load %arg0[%c0, %c0_0] : memref<8x1xf32, #tpu.memory_space<vmem>>, vector<8x1xf32>
    %c0_1 = arith.constant 0 : index
    %c0_2 = arith.constant 0 : index
    %1 = vector.load %arg1[%c0_1, %c0_2] : memref<1x512xf32, #tpu.memory_space<vmem>>, vector<1x512xf32>
    %2 = vector.broadcast %0 : vector<8x1xf32> to vector<8x512xf32>
    %3 = vector.broadcast %1 : vector<1x512xf32> to vector<8x512xf32>
    %4 = arith.mulf %2, %3 : vector<8x512xf32>
    %c0_3 = arith.constant 0 : index
    %c0_4 = arith.constant 0 : index
    %5 = vector.load %arg3[%c0_3, %c0_4] : memref<1x512xf32, #tpu.memory_space<vmem>>, vector<1x512xf32>
    %6 = vector.broadcast %5 : vector<1x512xf32> to vector<8x512xf32>
    %7 = arith.addf %4, %6 : vector<8x512xf32>
    %c0_5 = arith.constant 0 : index
    %c0_6 = arith.constant 0 : index
    %8 = vector.load %arg7[%c0_5, %c0_6] : memref<8x512xf32, #tpu.memory_space<vmem>>, vector<8x512xf32>
    tpu.vector_store %arg7[%c0_5, %c0_6], %7 {strides = array<i32>} : memref<8x512xf32, #tpu.memory_space<vmem>>, vector<8x512xf32>,
    %cst = arith.constant 0.000000e+00 : f32
    %9 = vector.broadcast %cst : f32 to vector<1x128xf32>
    %cst_7 = arith.constant 0.000000e+00 : f32
    %10 = vector.broadcast %cst_7 : f32 to vector<1x128xf32>
    %c0_8 = arith.constant 0 : index
    %c0_9 = arith.constant 0 : index
    %11 = vector.load %arg7[%c0_8, %c0_9] : memref<8x512xf32, #tpu.memory_space<vmem>>, vector<1x512xf32>
    %c0_10 = arith.constant 0 : index
    %c0_11 = arith.constant 0 : index
    %12 = vector.load %arg2[%c0_10, %c0_11] : memref<128x512xf32, #tpu.memory_space<vmem>>, vector<128x512xf32>
    %cst_12 = arith.constant dense<0.000000e+00> : vector<1x512xf32>
    %13 = tpu.matmul %9, %12, %cst_12 {dimension_numbers = #tpu.dot_dimension_numbers<[1], [0], [0], [1], [0, 0, 1, 1], [], []>} : vector<1x128xf32>, vector<128x512xf32>, vector<1x512xf32> -> vector<1x512xf32>
    %14 = arith.addf %11, %13 : vector<1x512xf32>
    %15 = vector.extract_strided_slice %14 {offsets = [0, 0], sizes = [1, 384], strides = [1, 1]} : vector<1x512xf32> to vector<1x384xf32>
    %16 = arith.negf %15 : vector<1x384xf32>
    %17 = math.exp %16 : vector<1x384xf32>
    %cst_13 = arith.constant 1.000000e+00 : f32
    %18 = vector.broadcast %cst_13 : f32 to vector<1x384xf32>
    %19 = arith.addf %18, %17 : vector<1x384xf32>
    %20 = arith.divf %18, %19 : vector<1x384xf32>
    %21 = vector.extract_strided_slice %14 {offsets = [0, 384], sizes = [1, 128], strides = [1, 1]} : vector<1x512xf32> to vector<1x128xf32>
    %22 = math.tanh %21 : vector<1x128xf32>
    %23 = vector.extract_strided_slice %20 {offsets = [0, 0], sizes = [1, 128], strides = [1, 1]} : vector<1x384xf32> to vector<1x128xf32>
    %24 = vector.extract_strided_slice %20 {offsets = [0, 128], sizes = [1, 128], strides = [1, 1]} : vector<1x384xf32> to vector<1x128xf32>
    %25 = vector.extract_strided_slice %20 {offsets = [0, 256], sizes = [1, 128], strides = [1, 1]} : vector<1x384xf32> to vector<1x128xf32>
    %26 = arith.mulf %24, %10 : vector<1x128xf32>
    %27 = arith.mulf %23, %22 : vector<1x128xf32>
    %28 = arith.addf %26, %27 : vector<1x128xf32>
    %29 = math.tanh %28 : vector<1x128xf32>
    %30 = arith.mulf %25, %29 : vector<1x128xf32>
    %c1 = arith.constant 1 : index
    %c0_14 = arith.constant 0 : index
    %31 = vector.load %arg7[%c1, %c0_14] : memref<8x512xf32, #tpu.memory_space<vmem>>, vector<1x512xf32>
    %c0_15 = arith.constant 0 : index
    %c0_16 = arith.constant 0 : index
    %32 = vector.load %arg2[%c0_15, %c0_16] : memref<128x512xf32, #tpu.memory_space<vmem>>, vector<128x512xf32>
    %cst_17 = arith.constant dense<0.000000e+00> : vector<1x512xf32>
    %33 = tpu.matmul %30, %32, %cst_17 {dimension_numbers = #tpu.dot_dimension_numbers<[1], [0], [0], [1], [0, 0, 1, 1], [], []>} : vector<1x128xf32>, vector<128x512xf32>, vector<1x512xf32> -> vector<1x512xf32>
    %34 = arith.addf %31, %33 : vector<1x512xf32>
    %35 = vector.extract_strided_slice %34 {offsets = [0, 0], sizes = [1, 384], strides = [1, 1]} : vector<1x512xf32> to vector<1x384xf32>
    %36 = arith.negf %35 : vector<1x384xf32>
    %37 = math.exp %36 : vector<1x384xf32>
    %cst_18 = arith.constant 1.000000e+00 : f32
    %38 = vector.broadcast %cst_18 : f32 to vector<1x384xf32>
    %39 = arith.addf %38, %37 : vector<1x384xf32>
    %40 = arith.divf %38, %39 : vector<1x384xf32>
    %41 = vector.extract_strided_slice %34 {offsets = [0, 384], sizes = [1, 128], strides = [1, 1]} : vector<1x512xf32> to vector<1x128xf32>
    %42 = math.tanh %41 : vector<1x128xf32>
    %43 = vector.extract_strided_slice %40 {offsets = [0, 0], sizes = [1, 128], strides = [1, 1]} : vector<1x384xf32> to vector<1x128xf32>
    %44 = vector.extract_strided_slice %40 {offsets = [0, 128], sizes = [1, 128], strides = [1, 1]} : vector<1x384xf32> to vector<1x128xf32>
    %45 = vector.extract_strided_slice %40 {offsets = [0, 256], sizes = [1, 128], strides = [1, 1]} : vector<1x384xf32> to vector<1x128xf32>
    %46 = arith.mulf %44, %28 : vector<1x128xf32>
    %47 = arith.mulf %43, %42 : vector<1x128xf32>
    %48 = arith.addf %46, %47 : vector<1x128xf32>
    %49 = math.tanh %48 : vector<1x128xf32>
    %50 = arith.mulf %45, %49 : vector<1x128xf32>
    %c2 = arith.constant 2 : index
    %c0_19 = arith.constant 0 : index
    %51 = vector.load %arg7[%c2, %c0_19] : memref<8x512xf32, #tpu.memory_space<vmem>>, vector<1x512xf32>
    %c0_20 = arith.constant 0 : index
    %c0_21 = arith.constant 0 : index
    %52 = vector.load %arg2[%c0_20, %c0_21] : memref<128x512xf32, #tpu.memory_space<vmem>>, vector<128x512xf32>
    %cst_22 = arith.constant dense<0.000000e+00> : vector<1x512xf32>
    %53 = tpu.matmul %50, %52, %cst_22 {dimension_numbers = #tpu.dot_dimension_numbers<[1], [0], [0], [1], [0, 0, 1, 1], [], []>} : vector<1x128xf32>, vector<128x512xf32>, vector<1x512xf32> -> vector<1x512xf32>
    %54 = arith.addf %51, %53 : vector<1x512xf32>
    %55 = vector.extract_strided_slice %54 {offsets = [0, 0], sizes = [1, 384], strides = [1, 1]} : vector<1x512xf32> to vector<1x384xf32>
    %56 = arith.negf %55 : vector<1x384xf32>
    %57 = math.exp %56 : vector<1x384xf32>
    %cst_23 = arith.constant 1.000000e+00 : f32
    %58 = vector.broadcast %cst_23 : f32 to vector<1x384xf32>
    %59 = arith.addf %58, %57 : vector<1x384xf32>
    %60 = arith.divf %58, %59 : vector<1x384xf32>
    %61 = vector.extract_strided_slice %54 {offsets = [0, 384], sizes = [1, 128], strides = [1, 1]} : vector<1x512xf32> to vector<1x128xf32>
    %62 = math.tanh %61 : vector<1x128xf32>
    %63 = vector.extract_strided_slice %60 {offsets = [0, 0], sizes = [1, 128], strides = [1, 1]} : vector<1x384xf32> to vector<1x128xf32>
    %64 = vector.extract_strided_slice %60 {offsets = [0, 128], sizes = [1, 128], strides = [1, 1]} : vector<1x384xf32> to vector<1x128xf32>
    %65 = vector.extract_strided_slice %60 {offsets = [0, 256], sizes = [1, 128], strides = [1, 1]} : vector<1x384xf32> to vector<1x128xf32>
    %66 = arith.mulf %64, %48 : vector<1x128xf32>
    %67 = arith.mulf %63, %62 : vector<1x128xf32>
    %68 = arith.addf %66, %67 : vector<1x128xf32>
    %69 = math.tanh %68 : vector<1x128xf32>
    %70 = arith.mulf %65, %69 : vector<1x128xf32>
    %c3 = arith.constant 3 : index
    %c0_24 = arith.constant 0 : index
    %71 = vector.load %arg7[%c3, %c0_24] : memref<8x512xf32, #tpu.memory_space<vmem>>, vector<1x512xf32>
    %c0_25 = arith.constant 0 : index
    %c0_26 = arith.constant 0 : index
    %72 = vector.load %arg2[%c0_25, %c0_26] : memref<128x512xf32, #tpu.memory_space<vmem>>, vector<128x512xf32>
    %cst_27 = arith.constant dense<0.000000e+00> : vector<1x512xf32>
    %73 = tpu.matmul %70, %72, %cst_27 {dimension_numbers = #tpu.dot_dimension_numbers<[1], [0], [0], [1], [0, 0, 1, 1], [], []>} : vector<1x128xf32>, vector<128x512xf32>, vector<1x512xf32> -> vector<1x512xf32>
    %74 = arith.addf %71, %73 : vector<1x512xf32>
    %75 = vector.extract_strided_slice %74 {offsets = [0, 0], sizes = [1, 384], strides = [1, 1]} : vector<1x512xf32> to vector<1x384xf32>
    %76 = arith.negf %75 : vector<1x384xf32>
    %77 = math.exp %76 : vector<1x384xf32>
    %cst_28 = arith.constant 1.000000e+00 : f32
    %78 = vector.broadcast %cst_28 : f32 to vector<1x384xf32>
    %79 = arith.addf %78, %77 : vector<1x384xf32>
    %80 = arith.divf %78, %79 : vector<1x384xf32>
    %81 = vector.extract_strided_slice %74 {offsets = [0, 384], sizes = [1, 128], strides = [1, 1]} : vector<1x512xf32> to vector<1x128xf32>
    %82 = math.tanh %81 : vector<1x128xf32>
    %83 = vector.extract_strided_slice %80 {offsets = [0, 0], sizes = [1, 128], strides = [1, 1]} : vector<1x384xf32> to vector<1x128xf32>
    %84 = vector.extract_strided_slice %80 {offsets = [0, 128], sizes = [1, 128], strides = [1, 1]} : vector<1x384xf32> to vector<1x128xf32>
    %85 = vector.extract_strided_slice %80 {offsets = [0, 256], sizes = [1, 128], strides = [1, 1]} : vector<1x384xf32> to vector<1x128xf32>
    %86 = arith.mulf %84, %68 : vector<1x128xf32>
    %87 = arith.mulf %83, %82 : vector<1x128xf32>
    %88 = arith.addf %86, %87 : vector<1x128xf32>
    %89 = math.tanh %88 : vector<1x128xf32>
    %90 = arith.mulf %85, %89 : vector<1x128xf32>
    %c4 = arith.constant 4 : index
    %c0_29 = arith.constant 0 : index
    %91 = vector.load %arg7[%c4, %c0_29] : memref<8x512xf32, #tpu.memory_space<vmem>>, vector<1x512xf32>
    %c0_30 = arith.constant 0 : index
    %c0_31 = arith.constant 0 : index
    %92 = vector.load %arg2[%c0_30, %c0_31] : memref<128x512xf32, #tpu.memory_space<vmem>>, vector<128x512xf32>
    %cst_32 = arith.constant dense<0.000000e+00> : vector<1x512xf32>
    %93 = tpu.matmul %90, %92, %cst_32 {dimension_numbers = #tpu.dot_dimension_numbers<[1], [0], [0], [1], [0, 0, 1, 1], [], []>} : vector<1x128xf32>, vector<128x512xf32>, vector<1x512xf32> -> vector<1x512xf32>
    %94 = arith.addf %91, %93 : vector<1x512xf32>
    %95 = vector.extract_strided_slice %94 {offsets = [0, 0], sizes = [1, 384], strides = [1, 1]} : vector<1x512xf32> to vector<1x384xf32>
    %96 = arith.negf %95 : vector<1x384xf32>
    %97 = math.exp %96 : vector<1x384xf32>
    %cst_33 = arith.constant 1.000000e+00 : f32
    %98 = vector.broadcast %cst_33 : f32 to vector<1x384xf32>
    %99 = arith.addf %98, %97 : vector<1x384xf32>
    %100 = arith.divf %98, %99 : vector<1x384xf32>
    %101 = vector.extract_strided_slice %94 {offsets = [0, 384], sizes = [1, 128], strides = [1, 1]} : vector<1x512xf32> to vector<1x128xf32>
    %102 = math.tanh %101 : vector<1x128xf32>
    %103 = vector.extract_strided_slice %100 {offsets = [0, 0], sizes = [1, 128], strides = [1, 1]} : vector<1x384xf32> to vector<1x128xf32>
    %104 = vector.extract_strided_slice %100 {offsets = [0, 128], sizes = [1, 128], strides = [1, 1]} : vector<1x384xf32> to vector<1x128xf32>
    %105 = vector.extract_strided_slice %100 {offsets = [0, 256], sizes = [1, 128], strides = [1, 1]} : vector<1x384xf32> to vector<1x128xf32>
    %106 = arith.mulf %104, %88 : vector<1x128xf32>
    %107 = arith.mulf %103, %102 : vector<1x128xf32>
    %108 = arith.addf %106, %107 : vector<1x128xf32>
    %109 = math.tanh %108 : vector<1x128xf32>
    %110 = arith.mulf %105, %109 : vector<1x128xf32>
    %c5 = arith.constant 5 : index
    %c0_34 = arith.constant 0 : index
    %111 = vector.load %arg7[%c5, %c0_34] : memref<8x512xf32, #tpu.memory_space<vmem>>, vector<1x512xf32>
    %c0_35 = arith.constant 0 : index
    %c0_36 = arith.constant 0 : index
    %112 = vector.load %arg2[%c0_35, %c0_36] : memref<128x512xf32, #tpu.memory_space<vmem>>, vector<128x512xf32>
    %cst_37 = arith.constant dense<0.000000e+00> : vector<1x512xf32>
    %113 = tpu.matmul %110, %112, %cst_37 {dimension_numbers = #tpu.dot_dimension_numbers<[1], [0], [0], [1], [0, 0, 1, 1], [], []>} : vector<1x128xf32>, vector<128x512xf32>, vector<1x512xf32> -> vector<1x512xf32>
    %114 = arith.addf %111, %113 : vector<1x512xf32>
    %115 = vector.extract_strided_slice %114 {offsets = [0, 0], sizes = [1, 384], strides = [1, 1]} : vector<1x512xf32> to vector<1x384xf32>
    %116 = arith.negf %115 : vector<1x384xf32>
    %117 = math.exp %116 : vector<1x384xf32>
    %cst_38 = arith.constant 1.000000e+00 : f32
    %118 = vector.broadcast %cst_38 : f32 to vector<1x384xf32>
    %119 = arith.addf %118, %117 : vector<1x384xf32>
    %120 = arith.divf %118, %119 : vector<1x384xf32>
    %121 = vector.extract_strided_slice %114 {offsets = [0, 384], sizes = [1, 128], strides = [1, 1]} : vector<1x512xf32> to vector<1x128xf32>
    %122 = math.tanh %121 : vector<1x128xf32>
    %123 = vector.extract_strided_slice %120 {offsets = [0, 0], sizes = [1, 128], strides = [1, 1]} : vector<1x384xf32> to vector<1x128xf32>
    %124 = vector.extract_strided_slice %120 {offsets = [0, 128], sizes = [1, 128], strides = [1, 1]} : vector<1x384xf32> to vector<1x128xf32>
    %125 = vector.extract_strided_slice %120 {offsets = [0, 256], sizes = [1, 128], strides = [1, 1]} : vector<1x384xf32> to vector<1x128xf32>
    %126 = arith.mulf %124, %108 : vector<1x128xf32>
    %127 = arith.mulf %123, %122 : vector<1x128xf32>
    %128 = arith.addf %126, %127 : vector<1x128xf32>
    %129 = math.tanh %128 : vector<1x128xf32>
    %130 = arith.mulf %125, %129 : vector<1x128xf32>
    %c6 = arith.constant 6 : index
    %c0_39 = arith.constant 0 : index
    %131 = vector.load %arg7[%c6, %c0_39] : memref<8x512xf32, #tpu.memory_space<vmem>>, vector<1x512xf32>
    %c0_40 = arith.constant 0 : index
    %c0_41 = arith.constant 0 : index
    %132 = vector.load %arg2[%c0_40, %c0_41] : memref<128x512xf32, #tpu.memory_space<vmem>>, vector<128x512xf32>
    %cst_42 = arith.constant dense<0.000000e+00> : vector<1x512xf32>
    %133 = tpu.matmul %130, %132, %cst_42 {dimension_numbers = #tpu.dot_dimension_numbers<[1], [0], [0], [1], [0, 0, 1, 1], [], []>} : vector<1x128xf32>, vector<128x512xf32>, vector<1x512xf32> -> vector<1x512xf32>
    %134 = arith.addf %131, %133 : vector<1x512xf32>
    %135 = vector.extract_strided_slice %134 {offsets = [0, 0], sizes = [1, 384], strides = [1, 1]} : vector<1x512xf32> to vector<1x384xf32>
    %136 = arith.negf %135 : vector<1x384xf32>
    %137 = math.exp %136 : vector<1x384xf32>
    %cst_43 = arith.constant 1.000000e+00 : f32
    %138 = vector.broadcast %cst_43 : f32 to vector<1x384xf32>
    %139 = arith.addf %138, %137 : vector<1x384xf32>
    %140 = arith.divf %138, %139 : vector<1x384xf32>
    %141 = vector.extract_strided_slice %134 {offsets = [0, 384], sizes = [1, 128], strides = [1, 1]} : vector<1x512xf32> to vector<1x128xf32>
    %142 = math.tanh %141 : vector<1x128xf32>
    %143 = vector.extract_strided_slice %140 {offsets = [0, 0], sizes = [1, 128], strides = [1, 1]} : vector<1x384xf32> to vector<1x128xf32>
    %144 = vector.extract_strided_slice %140 {offsets = [0, 128], sizes = [1, 128], strides = [1, 1]} : vector<1x384xf32> to vector<1x128xf32>
    %145 = vector.extract_strided_slice %140 {offsets = [0, 256], sizes = [1, 128], strides = [1, 1]} : vector<1x384xf32> to vector<1x128xf32>
    %146 = arith.mulf %144, %128 : vector<1x128xf32>
    %147 = arith.mulf %143, %142 : vector<1x128xf32>
    %148 = arith.addf %146, %147 : vector<1x128xf32>
    %149 = math.tanh %148 : vector<1x128xf32>
    %150 = arith.mulf %145, %149 : vector<1x128xf32>
    %c7 = arith.constant 7 : index
    %c0_44 = arith.constant 0 : index
    %151 = vector.load %arg7[%c7, %c0_44] : memref<8x512xf32, #tpu.memory_space<vmem>>, vector<1x512xf32>
    %c0_45 = arith.constant 0 : index
    %c0_46 = arith.constant 0 : index
    %152 = vector.load %arg2[%c0_45, %c0_46] : memref<128x512xf32, #tpu.memory_space<vmem>>, vector<128x512xf32>
    %cst_47 = arith.constant dense<0.000000e+00> : vector<1x512xf32>
    %153 = tpu.matmul %150, %152, %cst_47 {dimension_numbers = #tpu.dot_dimension_numbers<[1], [0], [0], [1], [0, 0, 1, 1], [], []>} : vector<1x128xf32>, vector<128x512xf32>, vector<1x512xf32> -> vector<1x512xf32>
    %154 = arith.addf %151, %153 : vector<1x512xf32>
    %155 = vector.extract_strided_slice %154 {offsets = [0, 0], sizes = [1, 384], strides = [1, 1]} : vector<1x512xf32> to vector<1x384xf32>
    %156 = arith.negf %155 : vector<1x384xf32>
    %157 = math.exp %156 : vector<1x384xf32>
    %cst_48 = arith.constant 1.000000e+00 : f32
    %158 = vector.broadcast %cst_48 : f32 to vector<1x384xf32>
    %159 = arith.addf %158, %157 : vector<1x384xf32>
    %160 = arith.divf %158, %159 : vector<1x384xf32>
    %161 = vector.extract_strided_slice %154 {offsets = [0, 384], sizes = [1, 128], strides = [1, 1]} : vector<1x512xf32> to vector<1x128xf32>
    %162 = math.tanh %161 : vector<1x128xf32>
    %163 = vector.extract_strided_slice %160 {offsets = [0, 0], sizes = [1, 128], strides = [1, 1]} : vector<1x384xf32> to vector<1x128xf32>
    %164 = vector.extract_strided_slice %160 {offsets = [0, 128], sizes = [1, 128], strides = [1, 1]} : vector<1x384xf32> to vector<1x128xf32>
    %165 = vector.extract_strided_slice %160 {offsets = [0, 256], sizes = [1, 128], strides = [1, 1]} : vector<1x384xf32> to vector<1x128xf32>
    %166 = arith.mulf %164, %148 : vector<1x128xf32>
    %167 = arith.mulf %163, %162 : vector<1x128xf32>
    %168 = arith.addf %166, %167 : vector<1x128xf32>
    %169 = math.tanh %168 : vector<1x128xf32>
    %170 = arith.mulf %165, %169 : vector<1x128xf32>
    %c0_49 = arith.constant 0 : index
    %c0_50 = arith.constant 0 : index
    %171 = vector.load %arg4[%c0_49, %c0_50] : memref<128x128xf32, #tpu.memory_space<vmem>>, vector<128x128xf32>
    %cst_51 = arith.constant dense<0.000000e+00> : vector<1x128xf32>
    %172 = tpu.matmul %170, %171, %cst_51 {dimension_numbers = #tpu.dot_dimension_numbers<[1], [0], [0], [1], [0, 0, 1, 1], [], []>} : vector<1x128xf32>, vector<128x128xf32>, vector<1x128xf32> -> vector<1x128xf32>
    %c0_52 = arith.constant 0 : index
    %c0_53 = arith.constant 0 : index
    %173 = vector.load %arg5[%c0_52, %c0_53] : memref<1x128xf32, #tpu.memory_space<vmem>>, vector<1x128xf32>
    %174 = arith.addf %172, %173 : vector<1x128xf32>
    %c0_54 = arith.constant 0 : index
    %c0_55 = arith.constant 0 : index
    %175 = vector.load %arg6[%c0_54, %c0_55] : memref<1x128xf32, #tpu.memory_space<vmem>>, vector<1x128xf32>
    tpu.vector_store %arg6[%c0_54, %c0_55], %174 {strides = array<i32>} : memref<1x128xf32, #tpu.memory_space<vmem>>, vector<1x128xf32>,
    return
  }
}

</mosaic_0001>

<llo_original>
// kernel: tpu_custom_call.1
$region0: #{tpu_custom_call.1}
  #allocation0 [shape = 'u32[]', space=smem, size = 0x4, offset = 0x4, fixed_abs, tag = 'smem constant byte address 0x4 - core index']
  #allocation1 [shape = 'u32[144,128]{1,0:T(1,128)}', space=vmem, size = 0x12000, scoped, tag = 'internal scratch']
  #allocation2 [shape = 'f32[8,512]{1,0:T(8,128)}', space=vmem, size = 0x4000, scoped, tag = 'scratch operand']
  %s0 = inlined_call_operand.vmem [shape: f32[8,1], index: 0, kind: input, shape index: {}]
  %s1 = inlined_call_operand.vmem [shape: f32[1,512], index: 1, kind: input, shape index: {}]
  %s2 = inlined_call_operand.hbm [shape: f32[128,512], index: 2, kind: input, shape index: {}]
  %s3 = inlined_call_operand.vmem [shape: f32[1,512], index: 3, kind: input, shape index: {}]
  %s4 = inlined_call_operand.hbm [shape: f32[128,128], index: 4, kind: input, shape index: {}]
  %s5 = inlined_call_operand.vmem [shape: f32[1,128], index: 5, kind: input, shape index: {}]
  %s6 = inlined_call_operand.hbm [shape: f32[1,128], index: 6, kind: output, shape index: {}]
  %s7 = sld [smem:[#allocation0]]
  $region42: #{tpu_custom_call.1} parent=0
    _
  %s9 = ssub.s32 1, %s7
  %s10 = scalar_select 0, %s9, %s7
  $region1: #{tpu_custom_call.1} parent=0
    #allocation3 [shape = 'u8[262144]{0}', space=vmem, size = 0x40000, scoped, tag = 'input window, operand 2, single buffered']
    #allocation4 [shape = 's32[1]{0}', space=sflag, size = 0x4, scoped, tag = 'scoped memory for tpu_custom_call.1']
    #allocation5 [shape = 's32[1]{0}', space=sflag, size = 0x4, scoped, tag = 'scoped memory for tpu_custom_call.1']
    #allocation6 [shape = 'u8[65536]{0}', space=vmem, size = 0x10000, scoped, tag = 'input window, operand 4, single buffered']
    #allocation7 [shape = 's32[1]{0}', space=sflag, size = 0x4, scoped, tag = 'scoped memory for tpu_custom_call.1']
    #allocation8 [shape = 'u8[512]{0}', space=vmem, size = 0x400, scoped, tag = 'output window, operand 0, single buffered']
    %11 = vsyncpa [#allocation4], 0
    %12 = vsyncpa [#allocation7], 0
    %13 = vsyncpa [#allocation5], 0
    // Predicated region
    $region2: #{tpu_custom_call.1} parent=1 // pred_check
      _
    $region3: #{tpu_custom_call.1} parent=1 // pred_check_branch
      %15 = sbr.rel (0) target = $region5
    $region4: #{tpu_custom_call.1} parent=1 // pred_region
      _
    $region5: #{tpu_custom_call.1} parent=1 // pred_fallthru
      _
    // Predicated region
    $region6: #{tpu_custom_call.1} parent=1 // pred_check
      _
    $region7: #{tpu_custom_call.1} parent=1 // pred_check_branch
      %17 = sbr.rel (0) target = $region9
    $region8: #{tpu_custom_call.1} parent=1 // pred_region
      _
    $region9: #{tpu_custom_call.1} parent=1 // pred_fallthru
      _
    // Predicated region
    $region10: #{tpu_custom_call.1} parent=1 // pred_check
      _
    $region11: #{tpu_custom_call.1} parent=1 // pred_check_branch
      %19 = sbr.rel (0) target = $region13
    $region12: #{tpu_custom_call.1} parent=1 // pred_region
      %s21 = ssub.s32 8192, 8192
      %22 = vsyncadd [#allocation4], %s21
      %s23 = sshll.u32 [#allocation3], 4
      %s24 = int_to_ptr.vmem [resolvable:$true] %s23
      %29 = dma.hbm_to_vmem [thread:$0]  %s2, 8192, %s24, [#allocation4], 512, 512, 32
    $region13: #{tpu_custom_call.1} parent=1 // pred_fallthru
      _
    // Predicated region
    $region14: #{tpu_custom_call.1} parent=1 // pred_check
      _
    $region15: #{tpu_custom_call.1} parent=1 // pred_check_branch
      %31 = sbr.rel (0) target = $region17
    $region16: #{tpu_custom_call.1} parent=1 // pred_region
      _
    $region17: #{tpu_custom_call.1} parent=1 // pred_fallthru
      _
    // Predicated region
    $region18: #{tpu_custom_call.1} parent=1 // pred_check
      _
    $region19: #{tpu_custom_call.1} parent=1 // pred_check_branch
      %33 = sbr.rel (0) target = $region21
    $region20: #{tpu_custom_call.1} parent=1 // pred_region
      %s35 = ssub.s32 2048, 2048
      %36 = vsyncadd [#allocation7], %s35
      %s37 = sshll.u32 [#allocation6], 4
      %s38 = int_to_ptr.vmem [resolvable:$true] %s37
      %43 = dma.hbm_to_vmem [thread:$0]  %s4, 2048, %s38, [#allocation7], 128, 128, 8
    $region21: #{tpu_custom_call.1} parent=1 // pred_fallthru
      _
    // Predicated region
    $region22: #{tpu_custom_call.1} parent=1 // pred_check
      _
    $region23: #{tpu_custom_call.1} parent=1 // pred_check_branch
      %45 = sbr.rel (0) target = $region25
    $region24: #{tpu_custom_call.1} parent=1 // pred_region
      _
    $region25: #{tpu_custom_call.1} parent=1 // pred_fallthru
      _
    // Predicated region
    $region26: #{tpu_custom_call.1} parent=1 // pred_check
      _
    $region27: #{tpu_custom_call.1} parent=1 // pred_check_branch
      %47 = sbr.rel (0) target = $region29
    $region28: #{tpu_custom_call.1} parent=1 // pred_region
      %48 = dma.done [#allocation4], 8192
    $region29: #{tpu_custom_call.1} parent=1 // pred_fallthru
      _
    // Predicated region
    $region30: #{tpu_custom_call.1} parent=1 // pred_check
      _
    $region31: #{tpu_custom_call.1} parent=1 // pred_check_branch
      %50 = sbr.rel (0) target = $region33
    $region32: #{tpu_custom_call.1} parent=1 // pred_region
      %51 = dma.done [#allocation7], 2048
    $region33: #{tpu_custom_call.1} parent=1 // pred_fallthru
      _
    %v52 = vld [vmem:[%s0] sm:$0xff]
    %v53 = vld [vmem:[%s1] sm:$0xf]
    %55 = vset.pattern.permute.xlu0 0
    %56 = vperm.xlu0 %55, %v52
    %v57 = vpop.permute.xlu0 %56
    %v60 = vlaneseq
    %v61 = vshrl.u32 %v60, 7
    %v62 = vsub.s32 0, %v61
    %v63 = vrot.slane %v53, %v62
    %v64 = vlaneseq
    %v65 = vshrl.u32 %v64, 7
    %v66 = vsub.s32 1, %v65
    %v67 = vrot.slane %v53, %v66
    %v68 = vlaneseq
    %v69 = vshrl.u32 %v68, 7
    %v70 = vsub.s32 2, %v69
    %v71 = vrot.slane %v53, %v70
    %v72 = vlaneseq
    %v73 = vshrl.u32 %v72, 7
    %v74 = vsub.s32 3, %v73
    %v75 = vrot.slane %v53, %v74
    %v80 = vmul.f32 %v57, %v63
    %v81 = vmul.f32 %v57, %v67
    %v82 = vmul.f32 %v57, %v71
    %v83 = vmul.f32 %v57, %v75
    %v84 = vld [vmem:[%s3] sm:$0xf]
    %v86 = vlaneseq
    %v87 = vshrl.u32 %v86, 7
    %v88 = vsub.s32 0, %v87
    %v89 = vrot.slane %v84, %v88
    %v90 = vlaneseq
    %v91 = vshrl.u32 %v90, 7
    %v92 = vsub.s32 1, %v91
    %v93 = vrot.slane %v84, %v92
    %v94 = vlaneseq
    %v95 = vshrl.u32 %v94, 7
    %v96 = vsub.s32 2, %v95
    %v97 = vrot.slane %v84, %v96
    %v98 = vlaneseq
    %v99 = vshrl.u32 %v98, 7
    %v100 = vsub.s32 3, %v99
    %v101 = vrot.slane %v84, %v100
    %v106 = vadd.f32 %v80, %v89
    %v107 = vadd.f32 %v81, %v93
    %v108 = vadd.f32 %v82, %v97
    %v109 = vadd.f32 %v83, %v101
    %110 = vst [vmem:[#allocation2] sm:$0xff] %v106
    %111 = vst [vmem:[#allocation2 + $0x8] sm:$0xff] %v107
    %112 = vst [vmem:[#allocation2 + $0x10] sm:$0xff] %v108
    %113 = vst [vmem:[#allocation2 + $0x18] sm:$0xff] %v109
    %v114 = vld [vmem:[#allocation2] ss:$8 sm:$0xf]
    %v115 = vld [vmem:[#allocation3] sm:$0xff]
    %v116 = vld [vmem:[#allocation3 + $0x8] sm:$0xff]
    %v117 = vld [vmem:[#allocation3 + $0x10] sm:$0xff]
    %v118 = vld [vmem:[#allocation3 + $0x18] sm:$0xff]
    %v119 = vld [vmem:[#allocation3 + $0x20] sm:$0xff]
    %v120 = vld [vmem:[#allocation3 + $0x28] sm:$0xff]
    %v121 = vld [vmem:[#allocation3 + $0x30] sm:$0xff]
    %v122 = vld [vmem:[#allocation3 + $0x38] sm:$0xff]
    %v123 = vld [vmem:[#allocation3 + $0x40] sm:$0xff]
    %v124 = vld [vmem:[#allocation3 + $0x48] sm:$0xff]
    %v125 = vld [vmem:[#allocation3 + $0x50] sm:$0xff]
    %v126 = vld [vmem:[#allocation3 + $0x58] sm:$0xff]
    %v127 = vld [vmem:[#allocation3 + $0x60] sm:$0xff]
    %v128 = vld [vmem:[#allocation3 + $0x68] sm:$0xff]
    %v129 = vld [vmem:[#allocation3 + $0x70] sm:$0xff]
    %v130 = vld [vmem:[#allocation3 + $0x78] sm:$0xff]
    %v131 = vld [vmem:[#allocation3 + $0x80] sm:$0xff]
    %v132 = vld [vmem:[#allocation3 + $0x88] sm:$0xff]
    %v133 = vld [vmem:[#allocation3 + $0x90] sm:$0xff]
    %v134 = vld [vmem:[#allocation3 + $0x98] sm:$0xff]
    %v135 = vld [vmem:[#allocation3 + $0xa0] sm:$0xff]
    %v136 = vld [vmem:[#allocation3 + $0xa8] sm:$0xff]
    %v137 = vld [vmem:[#allocation3 + $0xb0] sm:$0xff]
    %v138 = vld [vmem:[#allocation3 + $0xb8] sm:$0xff]
    %v139 = vld [vmem:[#allocation3 + $0xc0] sm:$0xff]
    %v140 = vld [vmem:[#allocation3 + $0xc8] sm:$0xff]
    %v141 = vld [vmem:[#allocation3 + $0xd0] sm:$0xff]
    %v142 = vld [vmem:[#allocation3 + $0xd8] sm:$0xff]
    %v143 = vld [vmem:[#allocation3 + $0xe0] sm:$0xff]
    %v144 = vld [vmem:[#allocation3 + $0xe8] sm:$0xff]
    %v145 = vld [vmem:[#allocation3 + $0xf0] sm:$0xff]
    %v146 = vld [vmem:[#allocation3 + $0xf8] sm:$0xff]
    %v147 = vld [vmem:[#allocation3 + $0x100] sm:$0xff]
    %v148 = vld [vmem:[#allocation3 + $0x108] sm:$0xff]
    %v149 = vld [vmem:[#allocation3 + $0x110] sm:$0xff]
    %v150 = vld [vmem:[#allocation3 + $0x118] sm:$0xff]
    %v151 = vld [vmem:[#allocation3 + $0x120] sm:$0xff]
    %v152 = vld [vmem:[#allocation3 + $0x128] sm:$0xff]
    %v153 = vld [vmem:[#allocation3 + $0x130] sm:$0xff]
    %v154 = vld [vmem:[#allocation3 + $0x138] sm:$0xff]
    %v155 = vld [vmem:[#allocation3 + $0x140] sm:$0xff]
    %v156 = vld [vmem:[#allocation3 + $0x148] sm:$0xff]
    %v157 = vld [vmem:[#allocation3 + $0x150] sm:$0xff]
    %v158 = vld [vmem:[#allocation3 + $0x158] sm:$0xff]
    %v159 = vld [vmem:[#allocation3 + $0x160] sm:$0xff]
    %v160 = vld [vmem:[#allocation3 + $0x168] sm:$0xff]
    %v161 = vld [vmem:[#allocation3 + $0x170] sm:$0xff]
    %v162 = vld [vmem:[#allocation3 + $0x178] sm:$0xff]
    %v163 = vld [vmem:[#allocation3 + $0x180] sm:$0xff]
    %v164 = vld [vmem:[#allocation3 + $0x188] sm:$0xff]
    %v165 = vld [vmem:[#allocation3 + $0x190] sm:$0xff]
    %v166 = vld [vmem:[#allocation3 + $0x198] sm:$0xff]
    %v167 = vld [vmem:[#allocation3 + $0x1a0] sm:$0xff]
    %v168 = vld [vmem:[#allocation3 + $0x1a8] sm:$0xff]
    %v169 = vld [vmem:[#allocation3 + $0x1b0] sm:$0xff]
    %v170 = vld [vmem:[#allocation3 + $0x1b8] sm:$0xff]
    %v171 = vld [vmem:[#allocation3 + $0x1c0] sm:$0xff]
    %v172 = vld [vmem:[#allocation3 + $0x1c8] sm:$0xff]
    %v173 = vld [vmem:[#allocation3 + $0x1d0] sm:$0xff]
    %v174 = vld [vmem:[#allocation3 + $0x1d8] sm:$0xff]
    %v175 = vld [vmem:[#allocation3 + $0x1e0] sm:$0xff]
    %v176 = vld [vmem:[#allocation3 + $0x1e8] sm:$0xff]
    %v177 = vld [vmem:[#allocation3 + $0x1f0] sm:$0xff]
    %v178 = vld [vmem:[#allocation3 + $0x1f8] sm:$0xff]
    %179 = vmatprep.subr.mxu0 %v176
    %180 = vmatpush1.msra.mxu0 %v175
    %181 = vmatprep.subr.mxu0 %v172
    %182 = vmatpush1.msra.mxu0 %v171
    %183 = vmatprep.subr.mxu0 %v168
    %184 = vmatpush1.msra.mxu0 %v167
    %185 = vmatprep.subr.mxu0 %v164
    %186 = vmatpush1.msra.mxu0 %v163
    %187 = vmatprep.subr.mxu0 %v160
    %188 = vmatpush1.msra.mxu0 %v159
    %189 = vmatprep.subr.mxu0 %v156
    %190 = vmatpush1.msra.mxu0 %v155
    %191 = vmatprep.subr.mxu0 %v152
    %192 = vmatpush1.msra.mxu0 %v151
    %193 = vmatprep.subr.mxu0 %v148
    %194 = vmatpush1.msra.mxu0 %v147
    %195 = vmatprep.subr.mxu0 %v144
    %196 = vmatpush1.msra.mxu0 %v143
    %197 = vmatprep.subr.mxu0 %v140
    %198 = vmatpush1.msra.mxu0 %v139
    %199 = vmatprep.subr.mxu0 %v136
    %200 = vmatpush1.msra.mxu0 %v135
    %201 = vmatprep.subr.mxu0 %v132
    %202 = vmatpush1.msra.mxu0 %v131
    %203 = vmatprep.subr.mxu0 %v128
    %204 = vmatpush1.msra.mxu0 %v127
    %205 = vmatprep.subr.mxu0 %v124
    %206 = vmatpush1.msra.mxu0 %v123
    %207 = vmatprep.subr.mxu0 %v120
    %208 = vmatpush1.msra.mxu0 %v119
    %209 = vmatprep.subr.mxu0 %v116
    %210 = vmatpush1.msra.mxu0 %v115
    %211 = vmatprep.subr.mxu0 0.0
    %212 = vmatpush2.msra.mxu0 0.0
    %213 = vmatprep.subr.mxu0 0.0
    %214 = vmatpush2.msra.mxu0 0.0
    %215 = vmatprep.subr.mxu0 0.0
    %216 = vmatpush2.msra.mxu0 0.0
    %217 = vmatprep.subr.mxu0 0.0
    %218 = vmatpush2.msra.mxu0 0.0
    %219 = vmatprep.subr.mxu0 0.0
    %220 = vmatpush2.msra.mxu0 0.0
    %221 = vmatprep.subr.mxu0 0.0
    %222 = vmatpush2.msra.mxu0 0.0
    %223 = vmatprep.subr.mxu0 0.0
    %224 = vmatpush2.msra.mxu0 0.0
    %225 = vmatprep.subr.mxu0 0.0
    %226 = vmatpush2.msra.mxu0 0.0
    %227 = vmatprep.subr.mxu0 0.0
    %228 = vmatpush2.msra.mxu0 0.0
    %229 = vmatprep.subr.mxu0 0.0
    %230 = vmatpush2.msra.mxu0 0.0
    %231 = vmatprep.subr.mxu0 0.0
    %232 = vmatpush2.msra.mxu0 0.0
    %233 = vmatprep.subr.mxu0 0.0
    %234 = vmatpush2.msra.mxu0 0.0
    %235 = vmatprep.subr.mxu0 0.0
    %236 = vmatpush2.msra.mxu0 0.0
    %237 = vmatprep.subr.mxu0 0.0
    %238 = vmatpush2.msra.mxu0 0.0
    %239 = vmatprep.subr.mxu0 0.0
    %240 = vmatpush2.msra.mxu0 0.0
    %241 = vmatprep.subr.mxu0 0.0
    %242 = vmatpush2.msra.mxu0 0.0
    %243 = vmatprep.mubr.f32.mxu0 0.0
    %244 = vmatmul.mubr.f32.gmra.mxu0 0.0
    %v245 = vpop.f32.mrf.mxu0
    %v246 = vadd.f32 0.0, %v245
    %v247 = vpop.f32.mrf.mxu0
    %v248 = vadd.f32 0.0, %v247
    %249 = vdwg.mxu0
    %250 = vmatprep.subr.mxu0 %v178
    %251 = vmatpush1.msra.mxu0 %v177
    %252 = vmatprep.subr.mxu0 %v174
    %253 = vmatpush1.msra.mxu0 %v173
    %254 = vmatprep.subr.mxu0 %v170
    %255 = vmatpush1.msra.mxu0 %v169
    %256 = vmatprep.subr.mxu0 %v166
    %257 = vmatpush1.msra.mxu0 %v165
    %258 = vmatprep.subr.mxu0 %v162
    %259 = vmatpush1.msra.mxu0 %v161
    %260 = vmatprep.subr.mxu0 %v158
    %261 = vmatpush1.msra.mxu0 %v157
    %262 = vmatprep.subr.mxu0 %v154
    %263 = vmatpush1.msra.mxu0 %v153
    %264 = vmatprep.subr.mxu0 %v150
    %265 = vmatpush1.msra.mxu0 %v149
    %266 = vmatprep.subr.mxu0 %v146
    %267 = vmatpush1.msra.mxu0 %v145
    %268 = vmatprep.subr.mxu0 %v142
    %269 = vmatpush1.msra.mxu0 %v141
    %270 = vmatprep.subr.mxu0 %v138
    %271 = vmatpush1.msra.mxu0 %v137
    %272 = vmatprep.subr.mxu0 %v134
    %273 = vmatpush1.msra.mxu0 %v133
    %274 = vmatprep.subr.mxu0 %v130
    %275 = vmatpush1.msra.mxu0 %v129
    %276 = vmatprep.subr.mxu0 %v126
    %277 = vmatpush1.msra.mxu0 %v125
    %278 = vmatprep.subr.mxu0 %v122
    %279 = vmatpush1.msra.mxu0 %v121
    %280 = vmatprep.subr.mxu0 %v118
    %281 = vmatpush1.msra.mxu0 %v117
    %282 = vmatprep.subr.mxu0 0.0
    %283 = vmatpush2.msra.mxu0 0.0
    %284 = vmatprep.subr.mxu0 0.0
    %285 = vmatpush2.msra.mxu0 0.0
    %286 = vmatprep.subr.mxu0 0.0
    %287 = vmatpush2.msra.mxu0 0.0
    %288 = vmatprep.subr.mxu0 0.0
    %289 = vmatpush2.msra.mxu0 0.0
    %290 = vmatprep.subr.mxu0 0.0
    %291 = vmatpush2.msra.mxu0 0.0
    %292 = vmatprep.subr.mxu0 0.0
    %293 = vmatpush2.msra.mxu0 0.0
    %294 = vmatprep.subr.mxu0 0.0
    %295 = vmatpush2.msra.mxu0 0.0
    %296 = vmatprep.subr.mxu0 0.0
    %297 = vmatpush2.msra.mxu0 0.0
    %298 = vmatprep.subr.mxu0 0.0
    %299 = vmatpush2.msra.mxu0 0.0
    %300 = vmatprep.subr.mxu0 0.0
    %301 = vmatpush2.msra.mxu0 0.0
    %302 = vmatprep.subr.mxu0 0.0
    %303 = vmatpush2.msra.mxu0 0.0
    %304 = vmatprep.subr.mxu0 0.0
    %305 = vmatpush2.msra.mxu0 0.0
    %306 = vmatprep.subr.mxu0 0.0
    %307 = vmatpush2.msra.mxu0 0.0
    %308 = vmatprep.subr.mxu0 0.0
    %309 = vmatpush2.msra.mxu0 0.0
    %310 = vmatprep.subr.mxu0 0.0
    %311 = vmatpush2.msra.mxu0 0.0
    %312 = vmatprep.subr.mxu0 0.0
    %313 = vmatpush2.msra.mxu0 0.0
    %314 = vmatprep.mubr.f32.mxu0 0.0
    %315 = vmatmul.mubr.f32.gmra.mxu0 0.0
    %v316 = vpop.f32.mrf.mxu0
    %v317 = vadd.f32 0.0, %v316
    %v318 = vpop.f32.mrf.mxu0
    %v319 = vadd.f32 0.0, %v318
    %320 = vdwg.mxu0
    %v325 = vcombine.low %v246, %v248
    %v326 = vcombine.low %v317, %v319
    %v328 = vunpack.c.l.s4 1966171168
    %v329 = vunpack.c.0.s8 %v328
    %v330 = vlaneseq
    %v331 = vshrl.u32 %v330, 7
    %v332 = vsub.s32 %v329, %v331
    %v333 = vrot.slane %v325, %v332
    %v335 = vunpack.c.l.s4 1966171168
    %v336 = vunpack.c.0.s8 %v335
    %v337 = vlaneseq
    %v338 = vshrl.u32 %v337, 7
    %v339 = vsub.s32 %v336, %v338
    %v340 = vrot.slane %v326, %v339
    %v341 = vcombine.low %v333, %v340
    %v343 = vunpack.c.l.s4 1966171168
    %v344 = vunpack.c.0.s8 %v343
    %v345 = vlaneseq
    %v346 = vshrl.u32 %v345, 7
    %v347 = vsub.s32 %v344, %v346
    %v348 = vrot.slane %v341, %v347
    %v350 = vadd.f32 %v114, %v348
    %v351 = vxor.u32 %v350, 2147483648
    %v352 = vmul.f32 %v351, 1.442695
    %v353 = vpow.pop %v352
    %v354 = vadd.f32 %v353, 1.0
    %v355 = vrcp.pop %v354
    %v356 = vmul.f32 1.0, %v355
    %v358 = vrot.slane %v350, 3
    %v360 = vtanh.pop %v358
    %v362 = vrot.slane %v356, 1
    %v364 = vmul.f32 %v362, 0.0
    %v365 = vmul.f32 %v356, %v360
    %v366 = vadd.f32 %v364, %v365
    %v367 = vtanh.pop %v366
    %v368 = vrot.slane %v356, 2
    %v370 = vmul.f32 %v368, %v367
    %s371 = scalar_lea.vmem [#allocation2], 1
    %v372 = vld [vmem:[%s371] ss:$8 sm:$0xf]
    %373 = vmatprep.subr.mxu0 %v176
    %374 = vmatpush1.msra.mxu0 %v175
    %375 = vmatprep.subr.mxu0 %v172
    %376 = vmatpush1.msra.mxu0 %v171
    %377 = vmatprep.subr.mxu0 %v168
    %378 = vmatpush1.msra.mxu0 %v167
    %379 = vmatprep.subr.mxu0 %v164
    %380 = vmatpush1.msra.mxu0 %v163
    %381 = vmatprep.subr.mxu0 %v160
    %382 = vmatpush1.msra.mxu0 %v159
    %383 = vmatprep.subr.mxu0 %v156
    %384 = vmatpush1.msra.mxu0 %v155
    %385 = vmatprep.subr.mxu0 %v152
    %386 = vmatpush1.msra.mxu0 %v151
    %387 = vmatprep.subr.mxu0 %v148
    %388 = vmatpush1.msra.mxu0 %v147
    %389 = vmatprep.subr.mxu0 %v144
    %390 = vmatpush1.msra.mxu0 %v143
    %391 = vmatprep.subr.mxu0 %v140
    %392 = vmatpush1.msra.mxu0 %v139
    %393 = vmatprep.subr.mxu0 %v136
    %394 = vmatpush1.msra.mxu0 %v135
    %395 = vmatprep.subr.mxu0 %v132
    %396 = vmatpush1.msra.mxu0 %v131
    %397 = vmatprep.subr.mxu0 %v128
    %398 = vmatpush1.msra.mxu0 %v127
    %399 = vmatprep.subr.mxu0 %v124
    %400 = vmatpush1.msra.mxu0 %v123
    %401 = vmatprep.subr.mxu0 %v120
    %402 = vmatpush1.msra.mxu0 %v119
    %403 = vmatprep.subr.mxu0 %v116
    %404 = vmatpush1.msra.mxu0 %v115
    %405 = vmatprep.subr.mxu0 0.0
    %406 = vmatpush2.msra.mxu0 0.0
    %407 = vmatprep.subr.mxu0 0.0
    %408 = vmatpush2.msra.mxu0 0.0
    %409 = vmatprep.subr.mxu0 0.0
    %410 = vmatpush2.msra.mxu0 0.0
    %411 = vmatprep.subr.mxu0 0.0
    %412 = vmatpush2.msra.mxu0 0.0
    %413 = vmatprep.subr.mxu0 0.0
    %414 = vmatpush2.msra.mxu0 0.0
    %415 = vmatprep.subr.mxu0 0.0
    %416 = vmatpush2.msra.mxu0 0.0
    %417 = vmatprep.subr.mxu0 0.0
    %418 = vmatpush2.msra.mxu0 0.0
    %419 = vmatprep.subr.mxu0 0.0
    %420 = vmatpush2.msra.mxu0 0.0
    %421 = vmatprep.subr.mxu0 0.0
    %422 = vmatpush2.msra.mxu0 0.0
    %423 = vmatprep.subr.mxu0 0.0
    %424 = vmatpush2.msra.mxu0 0.0
    %425 = vmatprep.subr.mxu0 0.0
    %426 = vmatpush2.msra.mxu0 0.0
    %427 = vmatprep.subr.mxu0 0.0
    %428 = vmatpush2.msra.mxu0 0.0
    %429 = vmatprep.subr.mxu0 0.0
    %430 = vmatpush2.msra.mxu0 0.0
    %431 = vmatprep.subr.mxu0 0.0
    %432 = vmatpush2.msra.mxu0 0.0
    %433 = vmatprep.subr.mxu0 0.0
    %434 = vmatpush2.msra.mxu0 0.0
    %435 = vmatprep.subr.mxu0 0.0
    %436 = vmatpush2.msra.mxu0 0.0
    %437 = vmatprep.mubr.f32.mxu0 0.0
    %438 = vmatmul.mubr.f32.gmra.mxu0 %v370
    %v439 = vpop.f32.mrf.mxu0
    %v440 = vadd.f32 0.0, %v439
    %v441 = vpop.f32.mrf.mxu0
    %v442 = vadd.f32 0.0, %v441
    %443 = vdwg.mxu0
    %444 = vmatprep.subr.mxu0 %v178
    %445 = vmatpush1.msra.mxu0 %v177
    %446 = vmatprep.subr.mxu0 %v174
    %447 = vmatpush1.msra.mxu0 %v173
    %448 = vmatprep.subr.mxu0 %v170
    %449 = vmatpush1.msra.mxu0 %v169
    %450 = vmatprep.subr.mxu0 %v166
    %451 = vmatpush1.msra.mxu0 %v165
    %452 = vmatprep.subr.mxu0 %v162
    %453 = vmatpush1.msra.mxu0 %v161
    %454 = vmatprep.subr.mxu0 %v158
    %455 = vmatpush1.msra.mxu0 %v157
    %456 = vmatprep.subr.mxu0 %v154
    %457 = vmatpush1.msra.mxu0 %v153
    %458 = vmatprep.subr.mxu0 %v150
    %459 = vmatpush1.msra.mxu0 %v149
    %460 = vmatprep.subr.mxu0 %v146
    %461 = vmatpush1.msra.mxu0 %v145
    %462 = vmatprep.subr.mxu0 %v142
    %463 = vmatpush1.msra.mxu0 %v141
    %464 = vmatprep.subr.mxu0 %v138
    %465 = vmatpush1.msra.mxu0 %v137
    %466 = vmatprep.subr.mxu0 %v134
    %467 = vmatpush1.msra.mxu0 %v133
    %468 = vmatprep.subr.mxu0 %v130
    %469 = vmatpush1.msra.mxu0 %v129
    %470 = vmatprep.subr.mxu0 %v126
    %471 = vmatpush1.msra.mxu0 %v125
    %472 = vmatprep.subr.mxu0 %v122
    %473 = vmatpush1.msra.mxu0 %v121
    %474 = vmatprep.subr.mxu0 %v118
    %475 = vmatpush1.msra.mxu0 %v117
    %476 = vmatprep.subr.mxu0 0.0
    %477 = vmatpush2.msra.mxu0 0.0
    %478 = vmatprep.subr.mxu0 0.0
    %479 = vmatpush2.msra.mxu0 0.0
    %480 = vmatprep.subr.mxu0 0.0
    %481 = vmatpush2.msra.mxu0 0.0
    %482 = vmatprep.subr.mxu0 0.0
    %483 = vmatpush2.msra.mxu0 0.0
    %484 = vmatprep.subr.mxu0 0.0
    %485 = vmatpush2.msra.mxu0 0.0
    %486 = vmatprep.subr.mxu0 0.0
    %487 = vmatpush2.msra.mxu0 0.0
    %488 = vmatprep.subr.mxu0 0.0
    %489 = vmatpush2.msra.mxu0 0.0
    %490 = vmatprep.subr.mxu0 0.0
    %491 = vmatpush2.msra.mxu0 0.0
    %492 = vmatprep.subr.mxu0 0.0
    %493 = vmatpush2.msra.mxu0 0.0
    %494 = vmatprep.subr.mxu0 0.0
    %495 = vmatpush2.msra.mxu0 0.0
    %496 = vmatprep.subr.mxu0 0.0
    %497 = vmatpush2.msra.mxu0 0.0
    %498 = vmatprep.subr.mxu0 0.0
    %499 = vmatpush2.msra.mxu0 0.0
    %500 = vmatprep.subr.mxu0 0.0
    %501 = vmatpush2.msra.mxu0 0.0
    %502 = vmatprep.subr.mxu0 0.0
    %503 = vmatpush2.msra.mxu0 0.0
    %504 = vmatprep.subr.mxu0 0.0
    %505 = vmatpush2.msra.mxu0 0.0
    %506 = vmatprep.subr.mxu0 0.0
    %507 = vmatpush2.msra.mxu0 0.0
    %508 = vmatprep.mubr.f32.mxu0 0.0
    %509 = vmatmul.mubr.f32.gmra.mxu0 %v370
    %v510 = vpop.f32.mrf.mxu0
    %v511 = vadd.f32 0.0, %v510
    %v512 = vpop.f32.mrf.mxu0
    %v513 = vadd.f32 0.0, %v512
    %514 = vdwg.mxu0
    %v519 = vcombine.low %v440, %v442
    %v520 = vcombine.low %v511, %v513
    %v522 = vunpack.c.l.s4 1966171168
    %v523 = vunpack.c.0.s8 %v522
    %v524 = vlaneseq
    %v525 = vshrl.u32 %v524, 7
    %v526 = vsub.s32 %v523, %v525
    %v527 = vrot.slane %v519, %v526
    %v529 = vunpack.c.l.s4 1966171168
    %v530 = vunpack.c.0.s8 %v529
    %v531 = vlaneseq
    %v532 = vshrl.u32 %v531, 7
    %v533 = vsub.s32 %v530, %v532
    %v534 = vrot.slane %v520, %v533
    %v535 = vcombine.low %v527, %v534
    %v537 = vunpack.c.l.s4 1966171168
    %v538 = vunpack.c.0.s8 %v537
    %v539 = vlaneseq
    %v540 = vshrl.u32 %v539, 7
    %v541 = vsub.s32 %v538, %v540
    %v542 = vrot.slane %v535, %v541
    %v544 = vadd.f32 %v372, %v542
    %v545 = vxor.u32 %v544, 2147483648
    %v546 = vmul.f32 %v545, 1.442695
    %v547 = vpow.pop %v546
    %v548 = vadd.f32 %v547, 1.0
    %v549 = vrcp.pop %v548
    %v550 = vmul.f32 1.0, %v549
    %v552 = vrot.slane %v544, 3
    %v554 = vtanh.pop %v552
    %v556 = vrot.slane %v550, 1
    %v558 = vmul.f32 %v556, %v366
    %v559 = vmul.f32 %v550, %v554
    %v560 = vadd.f32 %v558, %v559
    %v561 = vtanh.pop %v560
    %v562 = vrot.slane %v550, 2
    %v564 = vmul.f32 %v562, %v561
    %s565 = scalar_lea.vmem [#allocation2], 2
    %v566 = vld [vmem:[%s565] ss:$8 sm:$0xf]
    %567 = vmatprep.subr.mxu0 %v176
    %568 = vmatpush1.msra.mxu0 %v175
    %569 = vmatprep.subr.mxu0 %v172
    %570 = vmatpush1.msra.mxu0 %v171
    %571 = vmatprep.subr.mxu0 %v168
    %572 = vmatpush1.msra.mxu0 %v167
    %573 = vmatprep.subr.mxu0 %v164
    %574 = vmatpush1.msra.mxu0 %v163
    %575 = vmatprep.subr.mxu0 %v160
    %576 = vmatpush1.msra.mxu0 %v159
    %577 = vmatprep.subr.mxu0 %v156
    %578 = vmatpush1.msra.mxu0 %v155
    %579 = vmatprep.subr.mxu0 %v152
    %580 = vmatpush1.msra.mxu0 %v151
    %581 = vmatprep.subr.mxu0 %v148
    %582 = vmatpush1.msra.mxu0 %v147
    %583 = vmatprep.subr.mxu0 %v144
    %584 = vmatpush1.msra.mxu0 %v143
    %585 = vmatprep.subr.mxu0 %v140
    %586 = vmatpush1.msra.mxu0 %v139
    %587 = vmatprep.subr.mxu0 %v136
    %588 = vmatpush1.msra.mxu0 %v135
    %589 = vmatprep.subr.mxu0 %v132
    %590 = vmatpush1.msra.mxu0 %v131
    %591 = vmatprep.subr.mxu0 %v128
    %592 = vmatpush1.msra.mxu0 %v127
    %593 = vmatprep.subr.mxu0 %v124
    %594 = vmatpush1.msra.mxu0 %v123
    %595 = vmatprep.subr.mxu0 %v120
    %596 = vmatpush1.msra.mxu0 %v119
    %597 = vmatprep.subr.mxu0 %v116
    %598 = vmatpush1.msra.mxu0 %v115
    %599 = vmatprep.subr.mxu0 0.0
    %600 = vmatpush2.msra.mxu0 0.0
    %601 = vmatprep.subr.mxu0 0.0
    %602 = vmatpush2.msra.mxu0 0.0
    %603 = vmatprep.subr.mxu0 0.0
    %604 = vmatpush2.msra.mxu0 0.0
    %605 = vmatprep.subr.mxu0 0.0
    %606 = vmatpush2.msra.mxu0 0.0
    %607 = vmatprep.subr.mxu0 0.0
    %608 = vmatpush2.msra.mxu0 0.0
    %609 = vmatprep.subr.mxu0 0.0
    %610 = vmatpush2.msra.mxu0 0.0
    %611 = vmatprep.subr.mxu0 0.0
    %612 = vmatpush2.msra.mxu0 0.0
    %613 = vmatprep.subr.mxu0 0.0
    %614 = vmatpush2.msra.mxu0 0.0
    %615 = vmatprep.subr.mxu0 0.0
    %616 = vmatpush2.msra.mxu0 0.0
    %617 = vmatprep.subr.mxu0 0.0
    %618 = vmatpush2.msra.mxu0 0.0
    %619 = vmatprep.subr.mxu0 0.0
    %620 = vmatpush2.msra.mxu0 0.0
    %621 = vmatprep.subr.mxu0 0.0
    %622 = vmatpush2.msra.mxu0 0.0
    %623 = vmatprep.subr.mxu0 0.0
    %624 = vmatpush2.msra.mxu0 0.0
    %625 = vmatprep.subr.mxu0 0.0
    %626 = vmatpush2.msra.mxu0 0.0
    %627 = vmatprep.subr.mxu0 0.0
    %628 = vmatpush2.msra.mxu0 0.0
    %629 = vmatprep.subr.mxu0 0.0
    %630 = vmatpush2.msra.mxu0 0.0
    %631 = vmatprep.mubr.f32.mxu0 0.0
    %632 = vmatmul.mubr.f32.gmra.mxu0 %v564
    %v633 = vpop.f32.mrf.mxu0
    %v634 = vadd.f32 0.0, %v633
    %v635 = vpop.f32.mrf.mxu0
    %v636 = vadd.f32 0.0, %v635
    %637 = vdwg.mxu0
    %638 = vmatprep.subr.mxu0 %v178
    %639 = vmatpush1.msra.mxu0 %v177
    %640 = vmatprep.subr.mxu0 %v174
    %641 = vmatpush1.msra.mxu0 %v173
    %642 = vmatprep.subr.mxu0 %v170
    %643 = vmatpush1.msra.mxu0 %v169
    %644 = vmatprep.subr.mxu0 %v166
    %645 = vmatpush1.msra.mxu0 %v165
    %646 = vmatprep.subr.mxu0 %v162
    %647 = vmatpush1.msra.mxu0 %v161
    %648 = vmatprep.subr.mxu0 %v158
    %649 = vmatpush1.msra.mxu0 %v157
    %650 = vmatprep.subr.mxu0 %v154
    %651 = vmatpush1.msra.mxu0 %v153
    %652 = vmatprep.subr.mxu0 %v150
    %653 = vmatpush1.msra.mxu0 %v149
    %654 = vmatprep.subr.mxu0 %v146
    %655 = vmatpush1.msra.mxu0 %v145
    %656 = vmatprep.subr.mxu0 %v142
    %657 = vmatpush1.msra.mxu0 %v141
    %658 = vmatprep.subr.mxu0 %v138
    %659 = vmatpush1.msra.mxu0 %v137
    %660 = vmatprep.subr.mxu0 %v134
    %661 = vmatpush1.msra.mxu0 %v133
    %662 = vmatprep.subr.mxu0 %v130
    %663 = vmatpush1.msra.mxu0 %v129
    %664 = vmatprep.subr.mxu0 %v126
    %665 = vmatpush1.msra.mxu0 %v125
    %666 = vmatprep.subr.mxu0 %v122
    %667 = vmatpush1.msra.mxu0 %v121
    %668 = vmatprep.subr.mxu0 %v118
    %669 = vmatpush1.msra.mxu0 %v117
    %670 = vmatprep.subr.mxu0 0.0
    %671 = vmatpush2.msra.mxu0 0.0
    %672 = vmatprep.subr.mxu0 0.0
    %673 = vmatpush2.msra.mxu0 0.0
    %674 = vmatprep.subr.mxu0 0.0
    %675 = vmatpush2.msra.mxu0 0.0
    %676 = vmatprep.subr.mxu0 0.0
    %677 = vmatpush2.msra.mxu0 0.0
    %678 = vmatprep.subr.mxu0 0.0
    %679 = vmatpush2.msra.mxu0 0.0
    %680 = vmatprep.subr.mxu0 0.0
    %681 = vmatpush2.msra.mxu0 0.0
    %682 = vmatprep.subr.mxu0 0.0
    %683 = vmatpush2.msra.mxu0 0.0
    %684 = vmatprep.subr.mxu0 0.0
    %685 = vmatpush2.msra.mxu0 0.0
    %686 = vmatprep.subr.mxu0 0.0
    %687 = vmatpush2.msra.mxu0 0.0
    %688 = vmatprep.subr.mxu0 0.0
    %689 = vmatpush2.msra.mxu0 0.0
    %690 = vmatprep.subr.mxu0 0.0
    %691 = vmatpush2.msra.mxu0 0.0
    %692 = vmatprep.subr.mxu0 0.0
    %693 = vmatpush2.msra.mxu0 0.0
    %694 = vmatprep.subr.mxu0 0.0
    %695 = vmatpush2.msra.mxu0 0.0
    %696 = vmatprep.subr.mxu0 0.0
    %697 = vmatpush2.msra.mxu0 0.0
    %698 = vmatprep.subr.mxu0 0.0
    %699 = vmatpush2.msra.mxu0 0.0
    %700 = vmatprep.subr.mxu0 0.0
    %701 = vmatpush2.msra.mxu0 0.0
    %702 = vmatprep.mubr.f32.mxu0 0.0
    %703 = vmatmul.mubr.f32.gmra.mxu0 %v564
    %v704 = vpop.f32.mrf.mxu0
    %v705 = vadd.f32 0.0, %v704
    %v706 = vpop.f32.mrf.mxu0
    %v707 = vadd.f32 0.0, %v706
    %708 = vdwg.mxu0
    %v713 = vcombine.low %v634, %v636
    %v714 = vcombine.low %v705, %v707
    %v716 = vunpack.c.l.s4 1966171168
    %v717 = vunpack.c.0.s8 %v716
    %v718 = vlaneseq
    %v719 = vshrl.u32 %v718, 7
    %v720 = vsub.s32 %v717, %v719
    %v721 = vrot.slane %v713, %v720
    %v723 = vunpack.c.l.s4 1966171168
    %v724 = vunpack.c.0.s8 %v723
    %v725 = vlaneseq
    %v726 = vshrl.u32 %v725, 7
    %v727 = vsub.s32 %v724, %v726
    %v728 = vrot.slane %v714, %v727
    %v729 = vcombine.low %v721, %v728
    %v731 = vunpack.c.l.s4 1966171168
    %v732 = vunpack.c.0.s8 %v731
    %v733 = vlaneseq
    %v734 = vshrl.u32 %v733, 7
    %v735 = vsub.s32 %v732, %v734
    %v736 = vrot.slane %v729, %v735
    %v738 = vadd.f32 %v566, %v736
    %v739 = vxor.u32 %v738, 2147483648
    %v740 = vmul.f32 %v739, 1.442695
    %v741 = vpow.pop %v740
    %v742 = vadd.f32 %v741, 1.0
    %v743 = vrcp.pop %v742
    %v744 = vmul.f32 1.0, %v743
    %v746 = vrot.slane %v738, 3
    %v748 = vtanh.pop %v746
    %v750 = vrot.slane %v744, 1
    %v752 = vmul.f32 %v750, %v560
    %v753 = vmul.f32 %v744, %v748
    %v754 = vadd.f32 %v752, %v753
    %v755 = vtanh.pop %v754
    %v756 = vrot.slane %v744, 2
    %v758 = vmul.f32 %v756, %v755
    %s759 = scalar_lea.vmem [#allocation2], 3
    %v760 = vld [vmem:[%s759] ss:$8 sm:$0xf]
    %761 = vmatprep.subr.mxu0 %v176
    %762 = vmatpush1.msra.mxu0 %v175
    %763 = vmatprep.subr.mxu0 %v172
    %764 = vmatpush1.msra.mxu0 %v171
    %765 = vmatprep.subr.mxu0 %v168
    %766 = vmatpush1.msra.mxu0 %v167
    %767 = vmatprep.subr.mxu0 %v164
    %768 = vmatpush1.msra.mxu0 %v163
    %769 = vmatprep.subr.mxu0 %v160
    %770 = vmatpush1.msra.mxu0 %v159
    %771 = vmatprep.subr.mxu0 %v156
    %772 = vmatpush1.msra.mxu0 %v155
    %773 = vmatprep.subr.mxu0 %v152
    %774 = vmatpush1.msra.mxu0 %v151
    %775 = vmatprep.subr.mxu0 %v148
    %776 = vmatpush1.msra.mxu0 %v147
    %777 = vmatprep.subr.mxu0 %v144
    %778 = vmatpush1.msra.mxu0 %v143
    %779 = vmatprep.subr.mxu0 %v140
    %780 = vmatpush1.msra.mxu0 %v139
    %781 = vmatprep.subr.mxu0 %v136
    %782 = vmatpush1.msra.mxu0 %v135
    %783 = vmatprep.subr.mxu0 %v132
    %784 = vmatpush1.msra.mxu0 %v131
    %785 = vmatprep.subr.mxu0 %v128
    %786 = vmatpush1.msra.mxu0 %v127
    %787 = vmatprep.subr.mxu0 %v124
    %788 = vmatpush1.msra.mxu0 %v123
    %789 = vmatprep.subr.mxu0 %v120
    %790 = vmatpush1.msra.mxu0 %v119
    %791 = vmatprep.subr.mxu0 %v116
    %792 = vmatpush1.msra.mxu0 %v115
    %793 = vmatprep.subr.mxu0 0.0
    %794 = vmatpush2.msra.mxu0 0.0
    %795 = vmatprep.subr.mxu0 0.0
    %796 = vmatpush2.msra.mxu0 0.0
    %797 = vmatprep.subr.mxu0 0.0
    %798 = vmatpush2.msra.mxu0 0.0
    %799 = vmatprep.subr.mxu0 0.0
    %800 = vmatpush2.msra.mxu0 0.0
    %801 = vmatprep.subr.mxu0 0.0
    %802 = vmatpush2.msra.mxu0 0.0
    %803 = vmatprep.subr.mxu0 0.0
    %804 = vmatpush2.msra.mxu0 0.0
    %805 = vmatprep.subr.mxu0 0.0
    %806 = vmatpush2.msra.mxu0 0.0
    %807 = vmatprep.subr.mxu0 0.0
    %808 = vmatpush2.msra.mxu0 0.0
    %809 = vmatprep.subr.mxu0 0.0
    %810 = vmatpush2.msra.mxu0 0.0
    %811 = vmatprep.subr.mxu0 0.0
    %812 = vmatpush2.msra.mxu0 0.0
    %813 = vmatprep.subr.mxu0 0.0
    %814 = vmatpush2.msra.mxu0 0.0
    %815 = vmatprep.subr.mxu0 0.0
    %816 = vmatpush2.msra.mxu0 0.0
    %817 = vmatprep.subr.mxu0 0.0
    %818 = vmatpush2.msra.mxu0 0.0
    %819 = vmatprep.subr.mxu0 0.0
    %820 = vmatpush2.msra.mxu0 0.0
    %821 = vmatprep.subr.mxu0 0.0
    %822 = vmatpush2.msra.mxu0 0.0
    %823 = vmatprep.subr.mxu0 0.0
    %824 = vmatpush2.msra.mxu0 0.0
    %825 = vmatprep.mubr.f32.mxu0 0.0
    %826 = vmatmul.mubr.f32.gmra.mxu0 %v758
    %v827 = vpop.f32.mrf.mxu0
    %v828 = vadd.f32 0.0, %v827
    %v829 = vpop.f32.mrf.mxu0
    %v830 = vadd.f32 0.0, %v829
    %831 = vdwg.mxu0
    %832 = vmatprep.subr.mxu0 %v178
    %833 = vmatpush1.msra.mxu0 %v177
    %834 = vmatprep.subr.mxu0 %v174
    %835 = vmatpush1.msra.mxu0 %v173
    %836 = vmatprep.subr.mxu0 %v170
    %837 = vmatpush1.msra.mxu0 %v169
    %838 = vmatprep.subr.mxu0 %v166
    %839 = vmatpush1.msra.mxu0 %v165
    %840 = vmatprep.subr.mxu0 %v162
    %841 = vmatpush1.msra.mxu0 %v161
    %842 = vmatprep.subr.mxu0 %v158
    %843 = vmatpush1.msra.mxu0 %v157
    %844 = vmatprep.subr.mxu0 %v154
    %845 = vmatpush1.msra.mxu0 %v153
    %846 = vmatprep.subr.mxu0 %v150
    %847 = vmatpush1.msra.mxu0 %v149
    %848 = vmatprep.subr.mxu0 %v146
    %849 = vmatpush1.msra.mxu0 %v145
    %850 = vmatprep.subr.mxu0 %v142
    %851 = vmatpush1.msra.mxu0 %v141
    %852 = vmatprep.subr.mxu0 %v138
    %853 = vmatpush1.msra.mxu0 %v137
    %854 = vmatprep.subr.mxu0 %v134
    %855 = vmatpush1.msra.mxu0 %v133
    %856 = vmatprep.subr.mxu0 %v130
    %857 = vmatpush1.msra.mxu0 %v129
    %858 = vmatprep.subr.mxu0 %v126
    %859 = vmatpush1.msra.mxu0 %v125
    %860 = vmatprep.subr.mxu0 %v122
    %861 = vmatpush1.msra.mxu0 %v121
    %862 = vmatprep.subr.mxu0 %v118
    %863 = vmatpush1.msra.mxu0 %v117
    %864 = vmatprep.subr.mxu0 0.0
    %865 = vmatpush2.msra.mxu0 0.0
    %866 = vmatprep.subr.mxu0 0.0
    %867 = vmatpush2.msra.mxu0 0.0
    %868 = vmatprep.subr.mxu0 0.0
    %869 = vmatpush2.msra.mxu0 0.0
    %870 = vmatprep.subr.mxu0 0.0
    %871 = vmatpush2.msra.mxu0 0.0
    %872 = vmatprep.subr.mxu0 0.0
    %873 = vmatpush2.msra.mxu0 0.0
    %874 = vmatprep.subr.mxu0 0.0
    %875 = vmatpush2.msra.mxu0 0.0
    %876 = vmatprep.subr.mxu0 0.0
    %877 = vmatpush2.msra.mxu0 0.0
    %878 = vmatprep.subr.mxu0 0.0
    %879 = vmatpush2.msra.mxu0 0.0
    %880 = vmatprep.subr.mxu0 0.0
    %881 = vmatpush2.msra.mxu0 0.0
    %882 = vmatprep.subr.mxu0 0.0
    %883 = vmatpush2.msra.mxu0 0.0
    %884 = vmatprep.subr.mxu0 0.0
    %885 = vmatpush2.msra.mxu0 0.0
    %886 = vmatprep.subr.mxu0 0.0
    %887 = vmatpush2.msra.mxu0 0.0
    %888 = vmatprep.subr.mxu0 0.0
    %889 = vmatpush2.msra.mxu0 0.0
    %890 = vmatprep.subr.mxu0 0.0
    %891 = vmatpush2.msra.mxu0 0.0
    %892 = vmatprep.subr.mxu0 0.0
    %893 = vmatpush2.msra.mxu0 0.0
    %894 = vmatprep.subr.mxu0 0.0
    %895 = vmatpush2.msra.mxu0 0.0
    %896 = vmatprep.mubr.f32.mxu0 0.0
    %897 = vmatmul.mubr.f32.gmra.mxu0 %v758
    %v898 = vpop.f32.mrf.mxu0
    %v899 = vadd.f32 0.0, %v898
    %v900 = vpop.f32.mrf.mxu0
    %v901 = vadd.f32 0.0, %v900
    %902 = vdwg.mxu0
    %v907 = vcombine.low %v828, %v830
    %v908 = vcombine.low %v899, %v901
    %v910 = vunpack.c.l.s4 1966171168
    %v911 = vunpack.c.0.s8 %v910
    %v912 = vlaneseq
    %v913 = vshrl.u32 %v912, 7
    %v914 = vsub.s32 %v911, %v913
    %v915 = vrot.slane %v907, %v914
    %v917 = vunpack.c.l.s4 1966171168
    %v918 = vunpack.c.0.s8 %v917
    %v919 = vlaneseq
    %v920 = vshrl.u32 %v919, 7
    %v921 = vsub.s32 %v918, %v920
    %v922 = vrot.slane %v908, %v921
    %v923 = vcombine.low %v915, %v922
    %v925 = vunpack.c.l.s4 1966171168
    %v926 = vunpack.c.0.s8 %v925
    %v927 = vlaneseq
    %v928 = vshrl.u32 %v927, 7
    %v929 = vsub.s32 %v926, %v928
    %v930 = vrot.slane %v923, %v929
    %v932 = vadd.f32 %v760, %v930
    %v933 = vxor.u32 %v932, 2147483648
    %v934 = vmul.f32 %v933, 1.442695
    %v935 = vpow.pop %v934
    %v936 = vadd.f32 %v935, 1.0
    %v937 = vrcp.pop %v936
    %v938 = vmul.f32 1.0, %v937
    %v940 = vrot.slane %v932, 3
    %v942 = vtanh.pop %v940
    %v944 = vrot.slane %v938, 1
    %v946 = vmul.f32 %v944, %v754
    %v947 = vmul.f32 %v938, %v942
    %v948 = vadd.f32 %v946, %v947
    %v949 = vtanh.pop %v948
    %v950 = vrot.slane %v938, 2
    %v952 = vmul.f32 %v950, %v949
    %s953 = scalar_lea.vmem [#allocation2], 4
    %v954 = vld [vmem:[%s953] ss:$8 sm:$0xf]
    %955 = vmatprep.subr.mxu0 %v176
    %956 = vmatpush1.msra.mxu0 %v175
    %957 = vmatprep.subr.mxu0 %v172
    %958 = vmatpush1.msra.mxu0 %v171
    %959 = vmatprep.subr.mxu0 %v168
    %960 = vmatpush1.msra.mxu0 %v167
    %961 = vmatprep.subr.mxu0 %v164
    %962 = vmatpush1.msra.mxu0 %v163
    %963 = vmatprep.subr.mxu0 %v160
    %964 = vmatpush1.msra.mxu0 %v159
    %965 = vmatprep.subr.mxu0 %v156
    %966 = vmatpush1.msra.mxu0 %v155
    %967 = vmatprep.subr.mxu0 %v152
    %968 = vmatpush1.msra.mxu0 %v151
    %969 = vmatprep.subr.mxu0 %v148
    %970 = vmatpush1.msra.mxu0 %v147
    %971 = vmatprep.subr.mxu0 %v144
    %972 = vmatpush1.msra.mxu0 %v143
    %973 = vmatprep.subr.mxu0 %v140
    %974 = vmatpush1.msra.mxu0 %v139
    %975 = vmatprep.subr.mxu0 %v136
    %976 = vmatpush1.msra.mxu0 %v135
    %977 = vmatprep.subr.mxu0 %v132
    %978 = vmatpush1.msra.mxu0 %v131
    %979 = vmatprep.subr.mxu0 %v128
    %980 = vmatpush1.msra.mxu0 %v127
    %981 = vmatprep.subr.mxu0 %v124
    %982 = vmatpush1.msra.mxu0 %v123
    %983 = vmatprep.subr.mxu0 %v120
    %984 = vmatpush1.msra.mxu0 %v119
    %985 = vmatprep.subr.mxu0 %v116
    %986 = vmatpush1.msra.mxu0 %v115
    %987 = vmatprep.subr.mxu0 0.0
    %988 = vmatpush2.msra.mxu0 0.0
    %989 = vmatprep.subr.mxu0 0.0
    %990 = vmatpush2.msra.mxu0 0.0
    %991 = vmatprep.subr.mxu0 0.0
    %992 = vmatpush2.msra.mxu0 0.0
    %993 = vmatprep.subr.mxu0 0.0
    %994 = vmatpush2.msra.mxu0 0.0
    %995 = vmatprep.subr.mxu0 0.0
    %996 = vmatpush2.msra.mxu0 0.0
    %997 = vmatprep.subr.mxu0 0.0
    %998 = vmatpush2.msra.mxu0 0.0
    %999 = vmatprep.subr.mxu0 0.0
    %1000 = vmatpush2.msra.mxu0 0.0
    %1001 = vmatprep.subr.mxu0 0.0
    %1002 = vmatpush2.msra.mxu0 0.0
    %1003 = vmatprep.subr.mxu0 0.0
    %1004 = vmatpush2.msra.mxu0 0.0
    %1005 = vmatprep.subr.mxu0 0.0
    %1006 = vmatpush2.msra.mxu0 0.0
    %1007 = vmatprep.subr.mxu0 0.0
    %1008 = vmatpush2.msra.mxu0 0.0
    %1009 = vmatprep.subr.mxu0 0.0
    %1010 = vmatpush2.msra.mxu0 0.0
    %1011 = vmatprep.subr.mxu0 0.0
    %1012 = vmatpush2.msra.mxu0 0.0
    %1013 = vmatprep.subr.mxu0 0.0
    %1014 = vmatpush2.msra.mxu0 0.0
    %1015 = vmatprep.subr.mxu0 0.0
    %1016 = vmatpush2.msra.mxu0 0.0
    %1017 = vmatprep.subr.mxu0 0.0
    %1018 = vmatpush2.msra.mxu0 0.0
    %1019 = vmatprep.mubr.f32.mxu0 0.0
    %1020 = vmatmul.mubr.f32.gmra.mxu0 %v952
    %v1021 = vpop.f32.mrf.mxu0
    %v1022 = vadd.f32 0.0, %v1021
    %v1023 = vpop.f32.mrf.mxu0
    %v1024 = vadd.f32 0.0, %v1023
    %1025 = vdwg.mxu0
    %1026 = vmatprep.subr.mxu0 %v178
    %1027 = vmatpush1.msra.mxu0 %v177
    %1028 = vmatprep.subr.mxu0 %v174
    %1029 = vmatpush1.msra.mxu0 %v173
    %1030 = vmatprep.subr.mxu0 %v170
    %1031 = vmatpush1.msra.mxu0 %v169
    %1032 = vmatprep.subr.mxu0 %v166
    %1033 = vmatpush1.msra.mxu0 %v165
    %1034 = vmatprep.subr.mxu0 %v162
    %1035 = vmatpush1.msra.mxu0 %v161
    %1036 = vmatprep.subr.mxu0 %v158
    %1037 = vmatpush1.msra.mxu0 %v157
    %1038 = vmatprep.subr.mxu0 %v154
    %1039 = vmatpush1.msra.mxu0 %v153
    %1040 = vmatprep.subr.mxu0 %v150
    %1041 = vmatpush1.msra.mxu0 %v149
    %1042 = vmatprep.subr.mxu0 %v146
    %1043 = vmatpush1.msra.mxu0 %v145
    %1044 = vmatprep.subr.mxu0 %v142
    %1045 = vmatpush1.msra.mxu0 %v141
    %1046 = vmatprep.subr.mxu0 %v138
    %1047 = vmatpush1.msra.mxu0 %v137
    %1048 = vmatprep.subr.mxu0 %v134
    %1049 = vmatpush1.msra.mxu0 %v133
    %1050 = vmatprep.subr.mxu0 %v130
    %1051 = vmatpush1.msra.mxu0 %v129
    %1052 = vmatprep.subr.mxu0 %v126
    %1053 = vmatpush1.msra.mxu0 %v125
    %1054 = vmatprep.subr.mxu0 %v122
    %1055 = vmatpush1.msra.mxu0 %v121
    %1056 = vmatprep.subr.mxu0 %v118
    %1057 = vmatpush1.msra.mxu0 %v117
    %1058 = vmatprep.subr.mxu0 0.0
    %1059 = vmatpush2.msra.mxu0 0.0
    %1060 = vmatprep.subr.mxu0 0.0
    %1061 = vmatpush2.msra.mxu0 0.0
    %1062 = vmatprep.subr.mxu0 0.0
    %1063 = vmatpush2.msra.mxu0 0.0
    %1064 = vmatprep.subr.mxu0 0.0
    %1065 = vmatpush2.msra.mxu0 0.0
    %1066 = vmatprep.subr.mxu0 0.0
    %1067 = vmatpush2.msra.mxu0 0.0
    %1068 = vmatprep.subr.mxu0 0.0
    %1069 = vmatpush2.msra.mxu0 0.0
    %1070 = vmatprep.subr.mxu0 0.0
    %1071 = vmatpush2.msra.mxu0 0.0
    %1072 = vmatprep.subr.mxu0 0.0
    %1073 = vmatpush2.msra.mxu0 0.0
    %1074 = vmatprep.subr.mxu0 0.0
    %1075 = vmatpush2.msra.mxu0 0.0
    %1076 = vmatprep.subr.mxu0 0.0
    %1077 = vmatpush2.msra.mxu0 0.0
    %1078 = vmatprep.subr.mxu0 0.0
    %1079 = vmatpush2.msra.mxu0 0.0
    %1080 = vmatprep.subr.mxu0 0.0
    %1081 = vmatpush2.msra.mxu0 0.0
    %1082 = vmatprep.subr.mxu0 0.0
    %1083 = vmatpush2.msra.mxu0 0.0
    %1084 = vmatprep.subr.mxu0 0.0
    %1085 = vmatpush2.msra.mxu0 0.0
    %1086 = vmatprep.subr.mxu0 0.0
    %1087 = vmatpush2.msra.mxu0 0.0
    %1088 = vmatprep.subr.mxu0 0.0
    %1089 = vmatpush2.msra.mxu0 0.0
    %1090 = vmatprep.mubr.f32.mxu0 0.0
    %1091 = vmatmul.mubr.f32.gmra.mxu0 %v952
    %v1092 = vpop.f32.mrf.mxu0
    %v1093 = vadd.f32 0.0, %v1092
    %v1094 = vpop.f32.mrf.mxu0
    %v1095 = vadd.f32 0.0, %v1094
    %1096 = vdwg.mxu0
    %v1101 = vcombine.low %v1022, %v1024
    %v1102 = vcombine.low %v1093, %v1095
    %v1104 = vunpack.c.l.s4 1966171168
    %v1105 = vunpack.c.0.s8 %v1104
    %v1106 = vlaneseq
    %v1107 = vshrl.u32 %v1106, 7
    %v1108 = vsub.s32 %v1105, %v1107
    %v1109 = vrot.slane %v1101, %v1108
    %v1111 = vunpack.c.l.s4 1966171168
    %v1112 = vunpack.c.0.s8 %v1111
    %v1113 = vlaneseq
    %v1114 = vshrl.u32 %v1113, 7
    %v1115 = vsub.s32 %v1112, %v1114
    %v1116 = vrot.slane %v1102, %v1115
    %v1117 = vcombine.low %v1109, %v1116
    %v1119 = vunpack.c.l.s4 1966171168
    %v1120 = vunpack.c.0.s8 %v1119
    %v1121 = vlaneseq
    %v1122 = vshrl.u32 %v1121, 7
    %v1123 = vsub.s32 %v1120, %v1122
    %v1124 = vrot.slane %v1117, %v1123
    %v1126 = vadd.f32 %v954, %v1124
    %v1127 = vxor.u32 %v1126, 2147483648
    %v1128 = vmul.f32 %v1127, 1.442695
    %v1129 = vpow.pop %v1128
    %v1130 = vadd.f32 %v1129, 1.0
    %v1131 = vrcp.pop %v1130
    %v1132 = vmul.f32 1.0, %v1131
    %v1134 = vrot.slane %v1126, 3
    %v1136 = vtanh.pop %v1134
    %v1138 = vrot.slane %v1132, 1
    %v1140 = vmul.f32 %v1138, %v948
    %v1141 = vmul.f32 %v1132, %v1136
    %v1142 = vadd.f32 %v1140, %v1141
    %v1143 = vtanh.pop %v1142
    %v1144 = vrot.slane %v1132, 2
    %v1146 = vmul.f32 %v1144, %v1143
    %s1147 = scalar_lea.vmem [#allocation2], 5
    %v1148 = vld [vmem:[%s1147] ss:$8 sm:$0xf]
    %1149 = vmatprep.subr.mxu0 %v176
    %1150 = vmatpush1.msra.mxu0 %v175
    %1151 = vmatprep.subr.mxu0 %v172
    %1152 = vmatpush1.msra.mxu0 %v171
    %1153 = vmatprep.subr.mxu0 %v168
    %1154 = vmatpush1.msra.mxu0 %v167
    %1155 = vmatprep.subr.mxu0 %v164
    %1156 = vmatpush1.msra.mxu0 %v163
    %1157 = vmatprep.subr.mxu0 %v160
    %1158 = vmatpush1.msra.mxu0 %v159
    %1159 = vmatprep.subr.mxu0 %v156
    %1160 = vmatpush1.msra.mxu0 %v155
    %1161 = vmatprep.subr.mxu0 %v152
    %1162 = vmatpush1.msra.mxu0 %v151
    %1163 = vmatprep.subr.mxu0 %v148
    %1164 = vmatpush1.msra.mxu0 %v147
    %1165 = vmatprep.subr.mxu0 %v144
    %1166 = vmatpush1.msra.mxu0 %v143
    %1167 = vmatprep.subr.mxu0 %v140
    %1168 = vmatpush1.msra.mxu0 %v139
    %1169 = vmatprep.subr.mxu0 %v136
    %1170 = vmatpush1.msra.mxu0 %v135
    %1171 = vmatprep.subr.mxu0 %v132
    %1172 = vmatpush1.msra.mxu0 %v131
    %1173 = vmatprep.subr.mxu0 %v128
    %1174 = vmatpush1.msra.mxu0 %v127
    %1175 = vmatprep.subr.mxu0 %v124
    %1176 = vmatpush1.msra.mxu0 %v123
    %1177 = vmatprep.subr.mxu0 %v120
    %1178 = vmatpush1.msra.mxu0 %v119
    %1179 = vmatprep.subr.mxu0 %v116
    %1180 = vmatpush1.msra.mxu0 %v115
    %1181 = vmatprep.subr.mxu0 0.0
    %1182 = vmatpush2.msra.mxu0 0.0
    %1183 = vmatprep.subr.mxu0 0.0
    %1184 = vmatpush2.msra.mxu0 0.0
    %1185 = vmatprep.subr.mxu0 0.0
    %1186 = vmatpush2.msra.mxu0 0.0
    %1187 = vmatprep.subr.mxu0 0.0
    %1188 = vmatpush2.msra.mxu0 0.0
    %1189 = vmatprep.subr.mxu0 0.0
    %1190 = vmatpush2.msra.mxu0 0.0
    %1191 = vmatprep.subr.mxu0 0.0
    %1192 = vmatpush2.msra.mxu0 0.0
    %1193 = vmatprep.subr.mxu0 0.0
    %1194 = vmatpush2.msra.mxu0 0.0
    %1195 = vmatprep.subr.mxu0 0.0
    %1196 = vmatpush2.msra.mxu0 0.0
    %1197 = vmatprep.subr.mxu0 0.0
    %1198 = vmatpush2.msra.mxu0 0.0
    %1199 = vmatprep.subr.mxu0 0.0
    %1200 = vmatpush2.msra.mxu0 0.0
    %1201 = vmatprep.subr.mxu0 0.0
    %1202 = vmatpush2.msra.mxu0 0.0
    %1203 = vmatprep.subr.mxu0 0.0
    %1204 = vmatpush2.msra.mxu0 0.0
    %1205 = vmatprep.subr.mxu0 0.0
    %1206 = vmatpush2.msra.mxu0 0.0
    %1207 = vmatprep.subr.mxu0 0.0
    %1208 = vmatpush2.msra.mxu0 0.0
    %1209 = vmatprep.subr.mxu0 0.0
    %1210 = vmatpush2.msra.mxu0 0.0
    %1211 = vmatprep.subr.mxu0 0.0
    %1212 = vmatpush2.msra.mxu0 0.0
    %1213 = vmatprep.mubr.f32.mxu0 0.0
    %1214 = vmatmul.mubr.f32.gmra.mxu0 %v1146
    %v1215 = vpop.f32.mrf.mxu0
    %v1216 = vadd.f32 0.0, %v1215
    %v1217 = vpop.f32.mrf.mxu0
    %v1218 = vadd.f32 0.0, %v1217
    %1219 = vdwg.mxu0
    %1220 = vmatprep.subr.mxu0 %v178
    %1221 = vmatpush1.msra.mxu0 %v177
    %1222 = vmatprep.subr.mxu0 %v174
    %1223 = vmatpush1.msra.mxu0 %v173
    %1224 = vmatprep.subr.mxu0 %v170
    %1225 = vmatpush1.msra.mxu0 %v169
    %1226 = vmatprep.subr.mxu0 %v166
    %1227 = vmatpush1.msra.mxu0 %v165
    %1228 = vmatprep.subr.mxu0 %v162
    %1229 = vmatpush1.msra.mxu0 %v161
    %1230 = vmatprep.subr.mxu0 %v158
    %1231 = vmatpush1.msra.mxu0 %v157
    %1232 = vmatprep.subr.mxu0 %v154
    %1233 = vmatpush1.msra.mxu0 %v153
    %1234 = vmatprep.subr.mxu0 %v150
    %1235 = vmatpush1.msra.mxu0 %v149
    %1236 = vmatprep.subr.mxu0 %v146
    %1237 = vmatpush1.msra.mxu0 %v145
    %1238 = vmatprep.subr.mxu0 %v142
    %1239 = vmatpush1.msra.mxu0 %v141
    %1240 = vmatprep.subr.mxu0 %v138
    %1241 = vmatpush1.msra.mxu0 %v137
    %1242 = vmatprep.subr.mxu0 %v134
    %1243 = vmatpush1.msra.mxu0 %v133
    %1244 = vmatprep.subr.mxu0 %v130
    %1245 = vmatpush1.msra.mxu0 %v129
    %1246 = vmatprep.subr.mxu0 %v126
    %1247 = vmatpush1.msra.mxu0 %v125
    %1248 = vmatprep.subr.mxu0 %v122
    %1249 = vmatpush1.msra.mxu0 %v121
    %1250 = vmatprep.subr.mxu0 %v118
    %1251 = vmatpush1.msra.mxu0 %v117
    %1252 = vmatprep.subr.mxu0 0.0
    %1253 = vmatpush2.msra.mxu0 0.0
    %1254 = vmatprep.subr.mxu0 0.0
    %1255 = vmatpush2.msra.mxu0 0.0
    %1256 = vmatprep.subr.mxu0 0.0
    %1257 = vmatpush2.msra.mxu0 0.0
    %1258 = vmatprep.subr.mxu0 0.0
    %1259 = vmatpush2.msra.mxu0 0.0
    %1260 = vmatprep.subr.mxu0 0.0
    %1261 = vmatpush2.msra.mxu0 0.0
    %1262 = vmatprep.subr.mxu0 0.0
    %1263 = vmatpush2.msra.mxu0 0.0
    %1264 = vmatprep.subr.mxu0 0.0
    %1265 = vmatpush2.msra.mxu0 0.0
    %1266 = vmatprep.subr.mxu0 0.0
    %1267 = vmatpush2.msra.mxu0 0.0
    %1268 = vmatprep.subr.mxu0 0.0
    %1269 = vmatpush2.msra.mxu0 0.0
    %1270 = vmatprep.subr.mxu0 0.0
    %1271 = vmatpush2.msra.mxu0 0.0
    %1272 = vmatprep.subr.mxu0 0.0
    %1273 = vmatpush2.msra.mxu0 0.0
    %1274 = vmatprep.subr.mxu0 0.0
    %1275 = vmatpush2.msra.mxu0 0.0
    %1276 = vmatprep.subr.mxu0 0.0
    %1277 = vmatpush2.msra.mxu0 0.0
    %1278 = vmatprep.subr.mxu0 0.0
    %1279 = vmatpush2.msra.mxu0 0.0
    %1280 = vmatprep.subr.mxu0 0.0
    %1281 = vmatpush2.msra.mxu0 0.0
    %1282 = vmatprep.subr.mxu0 0.0
    %1283 = vmatpush2.msra.mxu0 0.0
    %1284 = vmatprep.mubr.f32.mxu0 0.0
    %1285 = vmatmul.mubr.f32.gmra.mxu0 %v1146
    %v1286 = vpop.f32.mrf.mxu0
    %v1287 = vadd.f32 0.0, %v1286
    %v1288 = vpop.f32.mrf.mxu0
    %v1289 = vadd.f32 0.0, %v1288
    %1290 = vdwg.mxu0
    %v1295 = vcombine.low %v1216, %v1218
    %v1296 = vcombine.low %v1287, %v1289
    %v1298 = vunpack.c.l.s4 1966171168
    %v1299 = vunpack.c.0.s8 %v1298
    %v1300 = vlaneseq
    %v1301 = vshrl.u32 %v1300, 7
    %v1302 = vsub.s32 %v1299, %v1301
    %v1303 = vrot.slane %v1295, %v1302
    %v1305 = vunpack.c.l.s4 1966171168
    %v1306 = vunpack.c.0.s8 %v1305
    %v1307 = vlaneseq
    %v1308 = vshrl.u32 %v1307, 7
    %v1309 = vsub.s32 %v1306, %v1308
    %v1310 = vrot.slane %v1296, %v1309
    %v1311 = vcombine.low %v1303, %v1310
    %v1313 = vunpack.c.l.s4 1966171168
    %v1314 = vunpack.c.0.s8 %v1313
    %v1315 = vlaneseq
    %v1316 = vshrl.u32 %v1315, 7
    %v1317 = vsub.s32 %v1314, %v1316
    %v1318 = vrot.slane %v1311, %v1317
    %v1320 = vadd.f32 %v1148, %v1318
    %v1321 = vxor.u32 %v1320, 2147483648
    %v1322 = vmul.f32 %v1321, 1.442695
    %v1323 = vpow.pop %v1322
    %v1324 = vadd.f32 %v1323, 1.0
    %v1325 = vrcp.pop %v1324
    %v1326 = vmul.f32 1.0, %v1325
    %v1328 = vrot.slane %v1320, 3
    %v1330 = vtanh.pop %v1328
    %v1332 = vrot.slane %v1326, 1
    %v1334 = vmul.f32 %v1332, %v1142
    %v1335 = vmul.f32 %v1326, %v1330
    %v1336 = vadd.f32 %v1334, %v1335
    %v1337 = vtanh.pop %v1336
    %v1338 = vrot.slane %v1326, 2
    %v1340 = vmul.f32 %v1338, %v1337
    %s1341 = scalar_lea.vmem [#allocation2], 6
    %v1342 = vld [vmem:[%s1341] ss:$8 sm:$0xf]
    %1343 = vmatprep.subr.mxu0 %v176
    %1344 = vmatpush1.msra.mxu0 %v175
    %1345 = vmatprep.subr.mxu0 %v172
    %1346 = vmatpush1.msra.mxu0 %v171
    %1347 = vmatprep.subr.mxu0 %v168
    %1348 = vmatpush1.msra.mxu0 %v167
    %1349 = vmatprep.subr.mxu0 %v164
    %1350 = vmatpush1.msra.mxu0 %v163
    %1351 = vmatprep.subr.mxu0 %v160
    %1352 = vmatpush1.msra.mxu0 %v159
    %1353 = vmatprep.subr.mxu0 %v156
    %1354 = vmatpush1.msra.mxu0 %v155
    %1355 = vmatprep.subr.mxu0 %v152
    %1356 = vmatpush1.msra.mxu0 %v151
    %1357 = vmatprep.subr.mxu0 %v148
    %1358 = vmatpush1.msra.mxu0 %v147
    %1359 = vmatprep.subr.mxu0 %v144
    %1360 = vmatpush1.msra.mxu0 %v143
    %1361 = vmatprep.subr.mxu0 %v140
    %1362 = vmatpush1.msra.mxu0 %v139
    %1363 = vmatprep.subr.mxu0 %v136
    %1364 = vmatpush1.msra.mxu0 %v135
    %1365 = vmatprep.subr.mxu0 %v132
    %1366 = vmatpush1.msra.mxu0 %v131
    %1367 = vmatprep.subr.mxu0 %v128
    %1368 = vmatpush1.msra.mxu0 %v127
    %1369 = vmatprep.subr.mxu0 %v124
    %1370 = vmatpush1.msra.mxu0 %v123
    %1371 = vmatprep.subr.mxu0 %v120
    %1372 = vmatpush1.msra.mxu0 %v119
    %1373 = vmatprep.subr.mxu0 %v116
    %1374 = vmatpush1.msra.mxu0 %v115
    %1375 = vmatprep.subr.mxu0 0.0
    %1376 = vmatpush2.msra.mxu0 0.0
    %1377 = vmatprep.subr.mxu0 0.0
    %1378 = vmatpush2.msra.mxu0 0.0
    %1379 = vmatprep.subr.mxu0 0.0
    %1380 = vmatpush2.msra.mxu0 0.0
    %1381 = vmatprep.subr.mxu0 0.0
    %1382 = vmatpush2.msra.mxu0 0.0
    %1383 = vmatprep.subr.mxu0 0.0
    %1384 = vmatpush2.msra.mxu0 0.0
    %1385 = vmatprep.subr.mxu0 0.0
    %1386 = vmatpush2.msra.mxu0 0.0
    %1387 = vmatprep.subr.mxu0 0.0
    %1388 = vmatpush2.msra.mxu0 0.0
    %1389 = vmatprep.subr.mxu0 0.0
    %1390 = vmatpush2.msra.mxu0 0.0
    %1391 = vmatprep.subr.mxu0 0.0
    %1392 = vmatpush2.msra.mxu0 0.0
    %1393 = vmatprep.subr.mxu0 0.0
    %1394 = vmatpush2.msra.mxu0 0.0
    %1395 = vmatprep.subr.mxu0 0.0
    %1396 = vmatpush2.msra.mxu0 0.0
    %1397 = vmatprep.subr.mxu0 0.0
    %1398 = vmatpush2.msra.mxu0 0.0
    %1399 = vmatprep.subr.mxu0 0.0
    %1400 = vmatpush2.msra.mxu0 0.0
    %1401 = vmatprep.subr.mxu0 0.0
    %1402 = vmatpush2.msra.mxu0 0.0
    %1403 = vmatprep.subr.mxu0 0.0
    %1404 = vmatpush2.msra.mxu0 0.0
    %1405 = vmatprep.subr.mxu0 0.0
    %1406 = vmatpush2.msra.mxu0 0.0
    %1407 = vmatprep.mubr.f32.mxu0 0.0
    %1408 = vmatmul.mubr.f32.gmra.mxu0 %v1340
    %v1409 = vpop.f32.mrf.mxu0
    %v1410 = vadd.f32 0.0, %v1409
    %v1411 = vpop.f32.mrf.mxu0
    %v1412 = vadd.f32 0.0, %v1411
    %1413 = vdwg.mxu0
    %1414 = vmatprep.subr.mxu0 %v178
    %1415 = vmatpush1.msra.mxu0 %v177
    %1416 = vmatprep.subr.mxu0 %v174
    %1417 = vmatpush1.msra.mxu0 %v173
    %1418 = vmatprep.subr.mxu0 %v170
    %1419 = vmatpush1.msra.mxu0 %v169
    %1420 = vmatprep.subr.mxu0 %v166
    %1421 = vmatpush1.msra.mxu0 %v165
    %1422 = vmatprep.subr.mxu0 %v162
    %1423 = vmatpush1.msra.mxu0 %v161
    %1424 = vmatprep.subr.mxu0 %v158
    %1425 = vmatpush1.msra.mxu0 %v157
    %1426 = vmatprep.subr.mxu0 %v154
    %1427 = vmatpush1.msra.mxu0 %v153
    %1428 = vmatprep.subr.mxu0 %v150
    %1429 = vmatpush1.msra.mxu0 %v149
    %1430 = vmatprep.subr.mxu0 %v146
    %1431 = vmatpush1.msra.mxu0 %v145
    %1432 = vmatprep.subr.mxu0 %v142
    %1433 = vmatpush1.msra.mxu0 %v141
    %1434 = vmatprep.subr.mxu0 %v138
    %1435 = vmatpush1.msra.mxu0 %v137
    %1436 = vmatprep.subr.mxu0 %v134
    %1437 = vmatpush1.msra.mxu0 %v133
    %1438 = vmatprep.subr.mxu0 %v130
    %1439 = vmatpush1.msra.mxu0 %v129
    %1440 = vmatprep.subr.mxu0 %v126
    %1441 = vmatpush1.msra.mxu0 %v125
    %1442 = vmatprep.subr.mxu0 %v122
    %1443 = vmatpush1.msra.mxu0 %v121
    %1444 = vmatprep.subr.mxu0 %v118
    %1445 = vmatpush1.msra.mxu0 %v117
    %1446 = vmatprep.subr.mxu0 0.0
    %1447 = vmatpush2.msra.mxu0 0.0
    %1448 = vmatprep.subr.mxu0 0.0
    %1449 = vmatpush2.msra.mxu0 0.0
    %1450 = vmatprep.subr.mxu0 0.0
    %1451 = vmatpush2.msra.mxu0 0.0
    %1452 = vmatprep.subr.mxu0 0.0
    %1453 = vmatpush2.msra.mxu0 0.0
    %1454 = vmatprep.subr.mxu0 0.0
    %1455 = vmatpush2.msra.mxu0 0.0
    %1456 = vmatprep.subr.mxu0 0.0
    %1457 = vmatpush2.msra.mxu0 0.0
    %1458 = vmatprep.subr.mxu0 0.0
    %1459 = vmatpush2.msra.mxu0 0.0
    %1460 = vmatprep.subr.mxu0 0.0
    %1461 = vmatpush2.msra.mxu0 0.0
    %1462 = vmatprep.subr.mxu0 0.0
    %1463 = vmatpush2.msra.mxu0 0.0
    %1464 = vmatprep.subr.mxu0 0.0
    %1465 = vmatpush2.msra.mxu0 0.0
    %1466 = vmatprep.subr.mxu0 0.0
    %1467 = vmatpush2.msra.mxu0 0.0
    %1468 = vmatprep.subr.mxu0 0.0
    %1469 = vmatpush2.msra.mxu0 0.0
    %1470 = vmatprep.subr.mxu0 0.0
    %1471 = vmatpush2.msra.mxu0 0.0
    %1472 = vmatprep.subr.mxu0 0.0
    %1473 = vmatpush2.msra.mxu0 0.0
    %1474 = vmatprep.subr.mxu0 0.0
    %1475 = vmatpush2.msra.mxu0 0.0
    %1476 = vmatprep.subr.mxu0 0.0
    %1477 = vmatpush2.msra.mxu0 0.0
    %1478 = vmatprep.mubr.f32.mxu0 0.0
    %1479 = vmatmul.mubr.f32.gmra.mxu0 %v1340
    %v1480 = vpop.f32.mrf.mxu0
    %v1481 = vadd.f32 0.0, %v1480
    %v1482 = vpop.f32.mrf.mxu0
    %v1483 = vadd.f32 0.0, %v1482
    %1484 = vdwg.mxu0
    %v1489 = vcombine.low %v1410, %v1412
    %v1490 = vcombine.low %v1481, %v1483
    %v1492 = vunpack.c.l.s4 1966171168
    %v1493 = vunpack.c.0.s8 %v1492
    %v1494 = vlaneseq
    %v1495 = vshrl.u32 %v1494, 7
    %v1496 = vsub.s32 %v1493, %v1495
    %v1497 = vrot.slane %v1489, %v1496
    %v1499 = vunpack.c.l.s4 1966171168
    %v1500 = vunpack.c.0.s8 %v1499
    %v1501 = vlaneseq
    %v1502 = vshrl.u32 %v1501, 7
    %v1503 = vsub.s32 %v1500, %v1502
    %v1504 = vrot.slane %v1490, %v1503
    %v1505 = vcombine.low %v1497, %v1504
    %v1507 = vunpack.c.l.s4 1966171168
    %v1508 = vunpack.c.0.s8 %v1507
    %v1509 = vlaneseq
    %v1510 = vshrl.u32 %v1509, 7
    %v1511 = vsub.s32 %v1508, %v1510
    %v1512 = vrot.slane %v1505, %v1511
    %v1514 = vadd.f32 %v1342, %v1512
    %v1515 = vxor.u32 %v1514, 2147483648
    %v1516 = vmul.f32 %v1515, 1.442695
    %v1517 = vpow.pop %v1516
    %v1518 = vadd.f32 %v1517, 1.0
    %v1519 = vrcp.pop %v1518
    %v1520 = vmul.f32 1.0, %v1519
    %v1522 = vrot.slane %v1514, 3
    %v1524 = vtanh.pop %v1522
    %v1526 = vrot.slane %v1520, 1
    %v1528 = vmul.f32 %v1526, %v1336
    %v1529 = vmul.f32 %v1520, %v1524
    %v1530 = vadd.f32 %v1528, %v1529
    %v1531 = vtanh.pop %v1530
    %v1532 = vrot.slane %v1520, 2
    %v1534 = vmul.f32 %v1532, %v1531
    %s1535 = scalar_lea.vmem [#allocation2], 7
    %v1536 = vld [vmem:[%s1535] ss:$8 sm:$0xf]
    %1537 = vmatprep.subr.mxu0 %v176
    %1538 = vmatpush1.msra.mxu0 %v175
    %1539 = vmatprep.subr.mxu0 %v172
    %1540 = vmatpush1.msra.mxu0 %v171
    %1541 = vmatprep.subr.mxu0 %v168
    %1542 = vmatpush1.msra.mxu0 %v167
    %1543 = vmatprep.subr.mxu0 %v164
    %1544 = vmatpush1.msra.mxu0 %v163
    %1545 = vmatprep.subr.mxu0 %v160
    %1546 = vmatpush1.msra.mxu0 %v159
    %1547 = vmatprep.subr.mxu0 %v156
    %1548 = vmatpush1.msra.mxu0 %v155
    %1549 = vmatprep.subr.mxu0 %v152
    %1550 = vmatpush1.msra.mxu0 %v151
    %1551 = vmatprep.subr.mxu0 %v148
    %1552 = vmatpush1.msra.mxu0 %v147
    %1553 = vmatprep.subr.mxu0 %v144
    %1554 = vmatpush1.msra.mxu0 %v143
    %1555 = vmatprep.subr.mxu0 %v140
    %1556 = vmatpush1.msra.mxu0 %v139
    %1557 = vmatprep.subr.mxu0 %v136
    %1558 = vmatpush1.msra.mxu0 %v135
    %1559 = vmatprep.subr.mxu0 %v132
    %1560 = vmatpush1.msra.mxu0 %v131
    %1561 = vmatprep.subr.mxu0 %v128
    %1562 = vmatpush1.msra.mxu0 %v127
    %1563 = vmatprep.subr.mxu0 %v124
    %1564 = vmatpush1.msra.mxu0 %v123
    %1565 = vmatprep.subr.mxu0 %v120
    %1566 = vmatpush1.msra.mxu0 %v119
    %1567 = vmatprep.subr.mxu0 %v116
    %1568 = vmatpush1.msra.mxu0 %v115
    %1569 = vmatprep.subr.mxu0 0.0
    %1570 = vmatpush2.msra.mxu0 0.0
    %1571 = vmatprep.subr.mxu0 0.0
    %1572 = vmatpush2.msra.mxu0 0.0
    %1573 = vmatprep.subr.mxu0 0.0
    %1574 = vmatpush2.msra.mxu0 0.0
    %1575 = vmatprep.subr.mxu0 0.0
    %1576 = vmatpush2.msra.mxu0 0.0
    %1577 = vmatprep.subr.mxu0 0.0
    %1578 = vmatpush2.msra.mxu0 0.0
    %1579 = vmatprep.subr.mxu0 0.0
    %1580 = vmatpush2.msra.mxu0 0.0
    %1581 = vmatprep.subr.mxu0 0.0
    %1582 = vmatpush2.msra.mxu0 0.0
    %1583 = vmatprep.subr.mxu0 0.0
    %1584 = vmatpush2.msra.mxu0 0.0
    %1585 = vmatprep.subr.mxu0 0.0
    %1586 = vmatpush2.msra.mxu0 0.0
    %1587 = vmatprep.subr.mxu0 0.0
    %1588 = vmatpush2.msra.mxu0 0.0
    %1589 = vmatprep.subr.mxu0 0.0
    %1590 = vmatpush2.msra.mxu0 0.0
    %1591 = vmatprep.subr.mxu0 0.0
    %1592 = vmatpush2.msra.mxu0 0.0
    %1593 = vmatprep.subr.mxu0 0.0
    %1594 = vmatpush2.msra.mxu0 0.0
    %1595 = vmatprep.subr.mxu0 0.0
    %1596 = vmatpush2.msra.mxu0 0.0
    %1597 = vmatprep.subr.mxu0 0.0
    %1598 = vmatpush2.msra.mxu0 0.0
    %1599 = vmatprep.subr.mxu0 0.0
    %1600 = vmatpush2.msra.mxu0 0.0
    %1601 = vmatprep.mubr.f32.mxu0 0.0
    %1602 = vmatmul.mubr.f32.gmra.mxu0 %v1534
    %v1603 = vpop.f32.mrf.mxu0
    %v1604 = vadd.f32 0.0, %v1603
    %v1605 = vpop.f32.mrf.mxu0
    %v1606 = vadd.f32 0.0, %v1605
    %1607 = vdwg.mxu0
    %1608 = vmatprep.subr.mxu0 %v178
    %1609 = vmatpush1.msra.mxu0 %v177
    %1610 = vmatprep.subr.mxu0 %v174
    %1611 = vmatpush1.msra.mxu0 %v173
    %1612 = vmatprep.subr.mxu0 %v170
    %1613 = vmatpush1.msra.mxu0 %v169
    %1614 = vmatprep.subr.mxu0 %v166
    %1615 = vmatpush1.msra.mxu0 %v165
    %1616 = vmatprep.subr.mxu0 %v162
    %1617 = vmatpush1.msra.mxu0 %v161
    %1618 = vmatprep.subr.mxu0 %v158
    %1619 = vmatpush1.msra.mxu0 %v157
    %1620 = vmatprep.subr.mxu0 %v154
    %1621 = vmatpush1.msra.mxu0 %v153
    %1622 = vmatprep.subr.mxu0 %v150
    %1623 = vmatpush1.msra.mxu0 %v149
    %1624 = vmatprep.subr.mxu0 %v146
    %1625 = vmatpush1.msra.mxu0 %v145
    %1626 = vmatprep.subr.mxu0 %v142
    %1627 = vmatpush1.msra.mxu0 %v141
    %1628 = vmatprep.subr.mxu0 %v138
    %1629 = vmatpush1.msra.mxu0 %v137
    %1630 = vmatprep.subr.mxu0 %v134
    %1631 = vmatpush1.msra.mxu0 %v133
    %1632 = vmatprep.subr.mxu0 %v130
    %1633 = vmatpush1.msra.mxu0 %v129
    %1634 = vmatprep.subr.mxu0 %v126
    %1635 = vmatpush1.msra.mxu0 %v125
    %1636 = vmatprep.subr.mxu0 %v122
    %1637 = vmatpush1.msra.mxu0 %v121
    %1638 = vmatprep.subr.mxu0 %v118
    %1639 = vmatpush1.msra.mxu0 %v117
    %1640 = vmatprep.subr.mxu0 0.0
    %1641 = vmatpush2.msra.mxu0 0.0
    %1642 = vmatprep.subr.mxu0 0.0
    %1643 = vmatpush2.msra.mxu0 0.0
    %1644 = vmatprep.subr.mxu0 0.0
    %1645 = vmatpush2.msra.mxu0 0.0
    %1646 = vmatprep.subr.mxu0 0.0
    %1647 = vmatpush2.msra.mxu0 0.0
    %1648 = vmatprep.subr.mxu0 0.0
    %1649 = vmatpush2.msra.mxu0 0.0
    %1650 = vmatprep.subr.mxu0 0.0
    %1651 = vmatpush2.msra.mxu0 0.0
    %1652 = vmatprep.subr.mxu0 0.0
    %1653 = vmatpush2.msra.mxu0 0.0
    %1654 = vmatprep.subr.mxu0 0.0
    %1655 = vmatpush2.msra.mxu0 0.0
    %1656 = vmatprep.subr.mxu0 0.0
    %1657 = vmatpush2.msra.mxu0 0.0
    %1658 = vmatprep.subr.mxu0 0.0
    %1659 = vmatpush2.msra.mxu0 0.0
    %1660 = vmatprep.subr.mxu0 0.0
    %1661 = vmatpush2.msra.mxu0 0.0
    %1662 = vmatprep.subr.mxu0 0.0
    %1663 = vmatpush2.msra.mxu0 0.0
    %1664 = vmatprep.subr.mxu0 0.0
    %1665 = vmatpush2.msra.mxu0 0.0
    %1666 = vmatprep.subr.mxu0 0.0
    %1667 = vmatpush2.msra.mxu0 0.0
    %1668 = vmatprep.subr.mxu0 0.0
    %1669 = vmatpush2.msra.mxu0 0.0
    %1670 = vmatprep.subr.mxu0 0.0
    %1671 = vmatpush2.msra.mxu0 0.0
    %1672 = vmatprep.mubr.f32.mxu0 0.0
    %1673 = vmatmul.mubr.f32.gmra.mxu0 %v1534
    %v1674 = vpop.f32.mrf.mxu0
    %v1675 = vadd.f32 0.0, %v1674
    %v1676 = vpop.f32.mrf.mxu0
    %v1677 = vadd.f32 0.0, %v1676
    %1678 = vdwg.mxu0
    %v1683 = vcombine.low %v1604, %v1606
    %v1684 = vcombine.low %v1675, %v1677
    %v1686 = vunpack.c.l.s4 1966171168
    %v1687 = vunpack.c.0.s8 %v1686
    %v1688 = vlaneseq
    %v1689 = vshrl.u32 %v1688, 7
    %v1690 = vsub.s32 %v1687, %v1689
    %v1691 = vrot.slane %v1683, %v1690
    %v1693 = vunpack.c.l.s4 1966171168
    %v1694 = vunpack.c.0.s8 %v1693
    %v1695 = vlaneseq
    %v1696 = vshrl.u32 %v1695, 7
    %v1697 = vsub.s32 %v1694, %v1696
    %v1698 = vrot.slane %v1684, %v1697
    %v1699 = vcombine.low %v1691, %v1698
    %v1701 = vunpack.c.l.s4 1966171168
    %v1702 = vunpack.c.0.s8 %v1701
    %v1703 = vlaneseq
    %v1704 = vshrl.u32 %v1703, 7
    %v1705 = vsub.s32 %v1702, %v1704
    %v1706 = vrot.slane %v1699, %v1705
    %v1708 = vadd.f32 %v1536, %v1706
    %v1709 = vxor.u32 %v1708, 2147483648
    %v1710 = vmul.f32 %v1709, 1.442695
    %v1711 = vpow.pop %v1710
    %v1712 = vadd.f32 %v1711, 1.0
    %v1713 = vrcp.pop %v1712
    %v1714 = vmul.f32 1.0, %v1713
    %v1716 = vrot.slane %v1708, 3
    %v1718 = vtanh.pop %v1716
    %v1720 = vrot.slane %v1714, 1
    %v1722 = vmul.f32 %v1720, %v1530
    %v1723 = vmul.f32 %v1714, %v1718
    %v1724 = vadd.f32 %v1722, %v1723
    %v1725 = vtanh.pop %v1724
    %v1726 = vrot.slane %v1714, 2
    %v1728 = vmul.f32 %v1726, %v1725
    %v1729 = vld [vmem:[#allocation6] sm:$0xff]
    %v1730 = vld [vmem:[#allocation6 + $0x8] sm:$0xff]
    %v1731 = vld [vmem:[#allocation6 + $0x10] sm:$0xff]
    %v1732 = vld [vmem:[#allocation6 + $0x18] sm:$0xff]
    %v1733 = vld [vmem:[#allocation6 + $0x20] sm:$0xff]
    %v1734 = vld [vmem:[#allocation6 + $0x28] sm:$0xff]
    %v1735 = vld [vmem:[#allocation6 + $0x30] sm:$0xff]
    %v1736 = vld [vmem:[#allocation6 + $0x38] sm:$0xff]
    %v1737 = vld [vmem:[#allocation6 + $0x40] sm:$0xff]
    %v1738 = vld [vmem:[#allocation6 + $0x48] sm:$0xff]
    %v1739 = vld [vmem:[#allocation6 + $0x50] sm:$0xff]
    %v1740 = vld [vmem:[#allocation6 + $0x58] sm:$0xff]
    %v1741 = vld [vmem:[#allocation6 + $0x60] sm:$0xff]
    %v1742 = vld [vmem:[#allocation6 + $0x68] sm:$0xff]
    %v1743 = vld [vmem:[#allocation6 + $0x70] sm:$0xff]
    %v1744 = vld [vmem:[#allocation6 + $0x78] sm:$0xff]
    %v1745 = vld [vmem:[%s5] sm:$0x1]
    %1746 = vmatprep.subr.mxu0 0.0
    %1747 = vmatpush1.msra.mxu0 %v1744
    %1748 = vmatprep.subr.mxu0 0.0
    %1749 = vmatpush1.msra.mxu0 %v1743
    %1750 = vmatprep.subr.mxu0 0.0
    %1751 = vmatpush1.msra.mxu0 %v1742
    %1752 = vmatprep.subr.mxu0 0.0
    %1753 = vmatpush1.msra.mxu0 %v1741
    %1754 = vmatprep.subr.mxu0 0.0
    %1755 = vmatpush1.msra.mxu0 %v1740
    %1756 = vmatprep.subr.mxu0 0.0
    %1757 = vmatpush1.msra.mxu0 %v1739
    %1758 = vmatprep.subr.mxu0 0.0
    %1759 = vmatpush1.msra.mxu0 %v1738
    %1760 = vmatprep.subr.mxu0 0.0
    %1761 = vmatpush1.msra.mxu0 %v1737
    %1762 = vmatprep.subr.mxu0 0.0
    %1763 = vmatpush1.msra.mxu0 %v1736
    %1764 = vmatprep.subr.mxu0 0.0
    %1765 = vmatpush1.msra.mxu0 %v1735
    %1766 = vmatprep.subr.mxu0 0.0
    %1767 = vmatpush1.msra.mxu0 %v1734
    %1768 = vmatprep.subr.mxu0 0.0
    %1769 = vmatpush1.msra.mxu0 %v1733
    %1770 = vmatprep.subr.mxu0 0.0
    %1771 = vmatpush1.msra.mxu0 %v1732
    %1772 = vmatprep.subr.mxu0 0.0
    %1773 = vmatpush1.msra.mxu0 %v1731
    %1774 = vmatprep.subr.mxu0 0.0
    %1775 = vmatpush1.msra.mxu0 %v1730
    %1776 = vmatprep.subr.mxu0 0.0
    %1777 = vmatpush1.msra.mxu0 %v1729
    %1778 = vmatprep.subr.mxu0 0.0
    %1779 = vmatpush2.msra.mxu0 0.0
    %1780 = vmatprep.subr.mxu0 0.0
    %1781 = vmatpush2.msra.mxu0 0.0
    %1782 = vmatprep.subr.mxu0 0.0
    %1783 = vmatpush2.msra.mxu0 0.0
    %1784 = vmatprep.subr.mxu0 0.0
    %1785 = vmatpush2.msra.mxu0 0.0
    %1786 = vmatprep.subr.mxu0 0.0
    %1787 = vmatpush2.msra.mxu0 0.0
    %1788 = vmatprep.subr.mxu0 0.0
    %1789 = vmatpush2.msra.mxu0 0.0
    %1790 = vmatprep.subr.mxu0 0.0
    %1791 = vmatpush2.msra.mxu0 0.0
    %1792 = vmatprep.subr.mxu0 0.0
    %1793 = vmatpush2.msra.mxu0 0.0
    %1794 = vmatprep.subr.mxu0 0.0
    %1795 = vmatpush2.msra.mxu0 0.0
    %1796 = vmatprep.subr.mxu0 0.0
    %1797 = vmatpush2.msra.mxu0 0.0
    %1798 = vmatprep.subr.mxu0 0.0
    %1799 = vmatpush2.msra.mxu0 0.0
    %1800 = vmatprep.subr.mxu0 0.0
    %1801 = vmatpush2.msra.mxu0 0.0
    %1802 = vmatprep.subr.mxu0 0.0
    %1803 = vmatpush2.msra.mxu0 0.0
    %1804 = vmatprep.subr.mxu0 0.0
    %1805 = vmatpush2.msra.mxu0 0.0
    %1806 = vmatprep.subr.mxu0 0.0
    %1807 = vmatpush2.msra.mxu0 0.0
    %1808 = vmatprep.subr.mxu0 0.0
    %1809 = vmatpush2.msra.mxu0 0.0
    %1810 = vmatprep.mubr.f32.mxu0 0.0
    %1811 = vmatmul.mubr.f32.gmra.mxu0 %v1728
    %v1812 = vpop.f32.mrf.mxu0
    %v1813 = vadd.f32 %v1745, %v1812
    %v1814 = vpop.f32.mrf.mxu0
    %1815 = vdwg.mxu0
    %1816 = vst [vmem:[#allocation8] sm:$0x1] %v1813
    // Predicated region
    $region34: #{tpu_custom_call.1} parent=1 // pred_check
      _
    $region35: #{tpu_custom_call.1} parent=1 // pred_check_branch
      %1818 = sbr.rel (0) target = $region37
    $region36: #{tpu_custom_call.1} parent=1 // pred_region
      %s1820 = ssub.s32 16, 16
      %1821 = vsyncadd [#allocation5], %s1820
      %s1823 = sshll.u32 [#allocation8], 4
      %s1824 = int_to_ptr.vmem [resolvable:$true] %s1823
      %1826 = dma.vmem_to_hbm [thread:$0]  %s1824, 16, %s6, [#allocation5]
    $region37: #{tpu_custom_call.1} parent=1 // pred_fallthru
      _
    // Predicated region
    $region38: #{tpu_custom_call.1} parent=1 // pred_check
      _
    $region39: #{tpu_custom_call.1} parent=1 // pred_check_branch
      %1828 = sbr.rel (0) target = $region41
    $region40: #{tpu_custom_call.1} parent=1 // pred_region
      %1829 = dma.done [#allocation5], 16
    $region41: #{tpu_custom_call.1} parent=1 // pred_fallthru
      _
    %1830 = vsyncpa [#allocation4], 1
    %1831 = vsyncpa [#allocation7], 1
    %1832 = vsyncpa [#allocation5], 1

</llo_original>
